<compile_context>
chip_gen: v7x
topology: tpu7x:2x2x1
jax: 0.10.0
libtpu: 0.0.40
codegen_flags: <defaults>
</compile_context>

<pallas_src>
from functools import partial

import jax
import jax.numpy as jnp
from jax.experimental import pallas as pl
from jax.experimental.pallas import tpu as pltpu


# ----------------------------------------------------------------------------
# Small helpers
# ----------------------------------------------------------------------------
def _hardswish(y):
    return y * jnp.clip(y + 3.0, 0.0, 6.0) * (1.0 / 6.0)


def _pick_row_tile(m, max_rows=512):
    """Row tile ~512, preferring >=4 grid steps (then >=2, then 1)."""
    cands = (512, 256, 128, 64, 32, 16, 8)
    for min_steps in (4, 2, 1):
        for cand in cands:
            if cand <= max_rows and m % cand == 0 and m // cand >= min_steps:
                return cand
    return m  # odd M fallback: single block (latent VMEM risk, not hit here)


def _pick_k_tile(k, max_k=512):
    for cand in (512, 256, 128, 64, 32, 16, 8):
        if cand <= max_k and k % cand == 0:
            return cand
    return k


def _pick_d_tile(D, HW, C, budget_bytes=4 << 20):
    """Largest D-plane tile whose halo-extended f32 working set fits a small
    VMEM budget (sized with v7x's 64 MiB total in mind), preferring >=2 tiles
    so the halo/pipelining path is exercised."""
    if HW % 8 == 0:
        cands = [td for td in range(1, D + 1)
                 if D % td == 0 and (td + 2) * HW * C * 4 <= budget_bytes]
        tiled = [td for td in cands if D // td >= 2]
        if tiled:
            return max(tiled)
        if cands:
            return max(cands)
    return D


# ----------------------------------------------------------------------------
# Kernels
# ----------------------------------------------------------------------------
def _ln_matmul_kernel(x_ref, g_ref, b_ref, w_ref, bias_ref, *out_refs, eps, act):
    """y = act(LN(x) @ W + bias); optionally also writes LN(x).  W is bf16."""
    if len(out_refs) == 2:
        y_ref, xn_ref = out_refs
    else:
        (y_ref,), xn_ref = out_refs, None
    x = x_ref[...].astype(jnp.float32)                                # (tm, C)
    mean = jnp.mean(x, axis=-1, keepdims=True)
    xc = x - mean
    var = jnp.mean(xc * xc, axis=-1, keepdims=True)
    xn = xc * jax.lax.rsqrt(var + eps)
    xn = xn * g_ref[...].astype(jnp.float32) + b_ref[...].astype(jnp.float32)
    if xn_ref is not None:
        xn_ref[...] = xn.astype(xn_ref.dtype)
    y = jnp.dot(xn.astype(jnp.bfloat16), w_ref[...],
                preferred_element_type=jnp.float32)
    y = y + bias_ref[...].astype(jnp.float32)
    if act == "hardswish":
        y = _hardswish(y)
    y_ref[...] = y.astype(y_ref.dtype)


def _matmul_kernel(a_ref, w_ref, bias_ref, *refs, act, has_res):
    """y = act(a @ W + bias) [+ residual]; bf16 MXU operands, f32 VMEM
    accumulator over the K reduction grid axis."""
    if has_res:
        res_ref, y_ref, acc_ref = refs
    else:
        y_ref, acc_ref = refs

    @pl.when(pl.program_id(1) == 0)
    def _():
        acc_ref[...] = jnp.zeros_like(acc_ref)

    acc_ref[...] += jnp.dot(a_ref[...], w_ref[...],
                            preferred_element_type=jnp.float32)

    @pl.when(pl.program_id(1) == pl.num_programs(1) - 1)
    def _():
        y = acc_ref[...] + bias_ref[...].astype(jnp.float32)
        if act == "hardswish":
            y = _hardswish(y)
        if has_res:
            y = y + res_ref[...].astype(jnp.float32)
        y_ref[...] = y.astype(y_ref.dtype)


def _attn_kernel(q_ref, kv_ref, o_ref, *, num_heads):
    """Pooled-KV attention for one (batch, q-row-tile); KV resident per batch.
    q is pre-scaled (scale folded into wq) and stored bf16, so there are no
    per-head casts.  Output is a lane-dense (tq, C) slab."""
    C = q_ref.shape[-1]
    hd = C // num_heads
    q = q_ref[0]                                                      # (tq, C) bf16
    kv = kv_ref[0]                                                    # (P, 2C) bf16
    outs = []
    # TODO(synk): pack heads into one block-diagonal MXU contraction so hd<128
    # does not underfill the 256-wide MXU on v6e/v7x.
    for h in range(num_heads):                                        # small, unrolled
        qh = q[:, h * hd:(h + 1) * hd]
        kh = kv[:, h * hd:(h + 1) * hd]
        vh = kv[:, C + h * hd:C + (h + 1) * hd]
        s = jax.lax.dot_general(qh, kh, (((1,), (1,)), ((), ())),
                                preferred_element_type=jnp.float32)   # (tq, P)
        m = jnp.max(s, axis=-1, keepdims=True)
        p = jnp.exp(s - m)
        denom = jnp.sum(p, axis=-1, keepdims=True)
        p = p * pl.reciprocal(denom, approx=True)
        outs.append(jnp.dot(p.astype(jnp.bfloat16), vh,
                            preferred_element_type=jnp.float32))      # (tq, hd)
    o_ref[0] = jnp.concatenate(outs, axis=-1).astype(o_ref.dtype)


def _dw_accumulate(xe, w_ref, Hh, Ww, HW, Ntot, d_lo=None, d_hi=None):
    """27-tap depthwise accumulation on flat (Ntot, C) tokens.

    Nested w -> h -> d roll structure: the h/w boundary masks are applied once
    per shifted source and shared by all deeper taps (the shifts at deeper
    levels are multiples of W / H*W, so the h/w coordinates - and hence the
    masks - are unchanged).  Rolls ride the XLU slot and are near-free."""
    n_idx = jax.lax.broadcasted_iota(jnp.int32, (Ntot, 1), 0)
    h_idx = (n_idx // Ww) % Hh
    w_idx = n_idx % Ww
    w_lo, w_hi = w_idx >= 1, w_idx < Ww - 1
    h_lo, h_hi = h_idx >= 1, h_idx < Hh - 1

    acc = jnp.zeros(xe.shape, jnp.float32)
    for dw in (-1, 0, 1):
        s = xe if dw == 0 else pltpu.roll(xe, shift=(-dw) % Ntot, axis=0)
        if dw == -1:
            s = jnp.where(w_lo, s, 0.0)
        elif dw == 1:
            s = jnp.where(w_hi, s, 0.0)
        for dh in (-1, 0, 1):
            t = s if dh == 0 else pltpu.roll(s, shift=(-dh * Ww) % Ntot, axis=0)
            if dh == -1:
                t = jnp.where(h_lo, t, 0.0)
            elif dh == 1:
                t = jnp.where(h_hi, t, 0.0)
            for dd in (-1, 0, 1):
                u = t if dd == 0 else pltpu.roll(t, shift=(-dd * HW) % Ntot, axis=0)
                if dd == -1 and d_lo is not None:
                    u = jnp.where(d_lo, u, 0.0)
                elif dd == 1 and d_hi is not None:
                    u = jnp.where(d_hi, u, 0.0)
                tap = w_ref[(dd + 1) * 9 + (dh + 1) * 3 + (dw + 1)].astype(jnp.float32)
                acc = acc + u * tap
    return acc


def _dwconv_halo_kernel(xc_ref, xp_ref, xn_ref, w_ref, b_ref, o_ref,
                        *, dims, td, act, residual):
    """Depthwise 3x3x3 conv on a td-plane tile with 1-plane halos.

    The d-boundary masks collapse into zeroing the halo planes that fall
    outside the global volume (done once), so only h/w masks remain."""
    _, Hh, Ww = dims
    HW = Hh * Ww
    C = xc_ref.shape[-1]
    Ntot = (td + 2) * HW

    i = pl.program_id(1)
    n_dt = pl.num_programs(1)

    xc = xc_ref[0].astype(jnp.float32)                                # (td*HW, C)
    xp = xp_ref[0, 0].astype(jnp.float32)                             # (HW, C)
    xn = xn_ref[0, 0].astype(jnp.float32)                             # (HW, C)
    xp = jnp.where(i > 0, xp, 0.0)            # prev plane invalid only on first tile
    xn = jnp.where(i < n_dt - 1, xn, 0.0)     # next plane invalid only on last tile
    xe = jnp.concatenate([xp, xc, xn], axis=0)                        # (Ntot, C)

    acc = _dw_accumulate(xe, w_ref, Hh, Ww, HW, Ntot)
    out = acc[HW:(td + 1) * HW, :] + b_ref[...].astype(jnp.float32)
    if residual:
        out = out + xc
    if act == "hardswish":
        out = _hardswish(out)
    o_ref[0] = out.astype(o_ref.dtype)


def _dwconv_full_kernel(x_ref, w_ref, b_ref, o_ref, *, dims, act, residual):
    """Whole-volume fallback (tiny pooled volumes where H*W % 8 != 0)."""
    Dd, Hh, Ww = dims
    HW = Hh * Ww
    Nsp = Dd * HW
    x = x_ref[0].astype(jnp.float32)                                  # (Nsp, C)
    n_idx = jax.lax.broadcasted_iota(jnp.int32, (Nsp, 1), 0)
    d_idx = n_idx // HW
    acc = _dw_accumulate(x, w_ref, Hh, Ww, HW, Nsp,
                         d_lo=d_idx >= 1, d_hi=d_idx < Dd - 1)
    out = acc + b_ref[...].astype(jnp.float32)
    if residual:
        out = out + x
    if act == "hardswish":
        out = _hardswish(out)
    o_ref[0] = out.astype(o_ref.dtype)


# ----------------------------------------------------------------------------
# Wrappers
# ----------------------------------------------------------------------------
def ln_matmul(x, gamma, beta, w, bias=None, act=None, return_xn=False,
              out_dtype=None, eps=1e-5):
    M, C = x.shape
    Nc = w.shape[1]
    out_dtype = out_dtype or x.dtype
    w = w.astype(jnp.bfloat16)                     # weights pre-cast in the wrapper
    g = gamma.reshape(1, C).astype(jnp.float32)
    b = beta.reshape(1, C).astype(jnp.float32)
    bias2 = (jnp.zeros((1, Nc), jnp.float32) if bias is None
             else bias.reshape(1, Nc).astype(jnp.float32))
    tm = _pick_row_tile(M)
    # TODO(synk): tile C / Nc for very large dim (full-row LN needs all of C resident).
    in_specs = [pl.BlockSpec((tm, C), lambda i: (i, 0)),
                pl.BlockSpec((1, C), lambda i: (0, 0)),
                pl.BlockSpec((1, C), lambda i: (0, 0)),
                pl.BlockSpec((C, Nc), lambda i: (0, 0)),
                pl.BlockSpec((1, Nc), lambda i: (0, 0))]
    if return_xn:
        out_shape = (jax.ShapeDtypeStruct((M, Nc), out_dtype),
                     jax.ShapeDtypeStruct((M, C), out_dtype))
        out_specs = (pl.BlockSpec((tm, Nc), lambda i: (i, 0)),
                     pl.BlockSpec((tm, C), lambda i: (i, 0)))
    else:
        out_shape = jax.ShapeDtypeStruct((M, Nc), out_dtype)
        out_specs = pl.BlockSpec((tm, Nc), lambda i: (i, 0))
    return pl.pallas_call(
        partial(_ln_matmul_kernel, eps=eps, act=act),
        out_shape=out_shape, grid=(M // tm,),
        in_specs=in_specs, out_specs=out_specs,
        compiler_params=pltpu.CompilerParams(dimension_semantics=("parallel",)),
    )(x, g, b, w, bias2)


def matmul_bias(a, w, bias=None, act=None, residual=None, out_dtype=None):
    M, K = a.shape
    Nc = w.shape[1]
    out_dtype = out_dtype or a.dtype
    a = a.astype(jnp.bfloat16)
    w = w.astype(jnp.bfloat16)
    bias2 = (jnp.zeros((1, Nc), jnp.float32) if bias is None
             else bias.reshape(1, Nc).astype(jnp.float32))
    tm = _pick_row_tile(M)
    tk = _pick_k_tile(K)
    grid = (M // tm, K // tk)
    in_specs = [pl.BlockSpec((tm, tk), lambda i, k: (i, k)),
                pl.BlockSpec((tk, Nc), lambda i, k: (k, 0)),
                pl.BlockSpec((1, Nc), lambda i, k: (0, 0))]
    args = [a, w, bias2]
    if residual is not None:
        in_specs.append(pl.BlockSpec((tm, Nc), lambda i, k: (i, 0)))
        args.append(residual)
    return pl.pallas_call(
        partial(_matmul_kernel, act=act, has_res=residual is not None),
        out_shape=jax.ShapeDtypeStruct((M, Nc), out_dtype),
        grid=grid,
        in_specs=in_specs,
        out_specs=pl.BlockSpec((tm, Nc), lambda i, k: (i, 0)),
        scratch_shapes=[pltpu.VMEM((tm, Nc), jnp.float32)],
        compiler_params=pltpu.CompilerParams(
            dimension_semantics=("parallel", "arbitrary")),
    )(*args)


def attention(q, kv, num_heads, out_dtype=None):
    B, N, C = q.shape
    P = kv.shape[1]
    out_dtype = out_dtype or q.dtype
    tq = _pick_row_tile(N)
    return pl.pallas_call(
        partial(_attn_kernel, num_heads=num_heads),
        out_shape=jax.ShapeDtypeStruct((B, N, C), out_dtype),
        grid=(B, N // tq),
        in_specs=[pl.BlockSpec((1, tq, C), lambda b, i: (b, i, 0)),
                  pl.BlockSpec((1, P, 2 * C), lambda b, i: (b, 0, 0))],  # KV resident per b
        out_specs=pl.BlockSpec((1, tq, C), lambda b, i: (b, i, 0)),
        compiler_params=pltpu.CompilerParams(
            dimension_semantics=("parallel", "parallel")),
    )(q, kv)


def dwconv3d_flat(x, dims, w27, bias, act=None, residual=False, out_dtype=None):
    """Depthwise 3x3x3 conv (stride 1, pad 1) on flat (B, D*H*W, C) tokens."""
    B, Nsp, C = x.shape
    Dd, Hh, Ww = dims
    HW = Hh * Ww
    out_dtype = out_dtype or x.dtype
    w27r = w27.reshape(27, 1, C)
    b2 = bias.reshape(1, C).astype(jnp.float32)

    td = _pick_d_tile(Dd, HW, C)
    use_halo = (HW % 8 == 0) and (Dd // td >= 2)
    if use_halo:
        x_planes = x.reshape(B, Dd, HW, C)
        n_dt = Dd // td
        return pl.pallas_call(
            partial(_dwconv_halo_kernel, dims=dims, td=td, act=act, residual=residual),
            out_shape=jax.ShapeDtypeStruct((B, Nsp, C), out_dtype),
            grid=(B, n_dt),
            in_specs=[
                # center tile, as flat tokens
                pl.BlockSpec((1, td * HW, C), lambda b, i: (b, i, 0)),
                # previous / next halo planes (clamped at the volume boundary;
                # the kernel zeroes the clamped copies)
                pl.BlockSpec((1, 1, HW, C),
                             lambda b, i: (b, jnp.maximum(i * td - 1, 0), 0, 0)),
                pl.BlockSpec((1, 1, HW, C),
                             lambda b, i: (b, jnp.minimum((i + 1) * td, Dd - 1), 0, 0)),
                pl.BlockSpec((27, 1, C), lambda b, i: (0, 0, 0)),
                pl.BlockSpec((1, C), lambda b, i: (0, 0)),
            ],
            out_specs=pl.BlockSpec((1, td * HW, C), lambda b, i: (b, i, 0)),
            compiler_params=pltpu.CompilerParams(
                dimension_semantics=("parallel", "parallel")),
        )(x, x_planes, x_planes, w27r, b2)

    # tiny-volume fallback (whole volume per grid step)
    return pl.pallas_call(
        partial(_dwconv_full_kernel, dims=dims, act=act, residual=residual),
        out_shape=jax.ShapeDtypeStruct((B, Nsp, C), out_dtype),
        grid=(B,),
        in_specs=[pl.BlockSpec((1, Nsp, C), lambda b: (b, 0, 0)),
                  pl.BlockSpec((27, 1, C), lambda b: (0, 0, 0)),
                  pl.BlockSpec((1, C), lambda b: (0, 0))],
        out_specs=pl.BlockSpec((1, Nsp, C), lambda b: (b, 0, 0)),
        compiler_params=pltpu.CompilerParams(dimension_semantics=("parallel",)),
    )(x, w27r, b2)


# ----------------------------------------------------------------------------
# Plain-JAX glue
# ----------------------------------------------------------------------------
def adaptive_avg_pool3d_cl(x, out_size):
    # Equivalent to F.adaptive_avg_pool3d when sizes divide evenly.
    # TODO(synk): PyTorch handles non-divisible bins; only even splits supported here.
    B, D, H, W, C = x.shape
    od, oh, ow = out_size
    fd, fh, fw = D // od, H // oh, W // ow
    assert od * fd == D and oh * fh == H and ow * fw == W
    x = x.reshape(B, od, fd, oh, fh, ow, fw, C).astype(jnp.float32)
    return x.mean(axis=(2, 4, 6))


# ----------------------------------------------------------------------------
# Block forward
# ----------------------------------------------------------------------------
def block_forward(x, D, H, W, p, num_heads, pool_ratios):
    B, N, C = x.shape
    hd = C // num_heads
    scale = hd ** (-0.5)
    x2d = x.reshape(B * N, C)                              # f32 residual base

    # scale folded into wq (q @ (wq*scale) == (q @ wq) * scale)
    wq_scaled = p["wq"].astype(jnp.float32) * scale

    # --- attention branch: fused LN1 + q-projection; LN1(x) reused for pooling ---
    q2d, xn1 = ln_matmul(x2d, p["norm1_g"], p["norm1_b"], wq_scaled,
                         return_xn=True, out_dtype=jnp.bfloat16)
    xn1_3d = xn1.reshape(B, N, C)

    pools = []
    for ratio, dc in zip(pool_ratios, p["d_convs"]):
        od, oh, ow = round(D / ratio), round(H / ratio), round(W / ratio)
        if (od, oh, ow) == (D, H, W):
            pool = xn1_3d                                   # ratio==1: identity pooling
        else:
            pool = adaptive_avg_pool3d_cl(xn1_3d.reshape(B, D, H, W, C), (od, oh, ow))
            pool = pool.reshape(B, od * oh * ow, C).astype(jnp.bfloat16)
        # pool + l(pool): residual fused into the depthwise-conv kernel
        pools.append(dwconv3d_flat(pool, (od, oh, ow), dc["w"], dc["b"],
                                   residual=True, out_dtype=jnp.bfloat16))
    pools = jnp.concatenate(pools, axis=1)                  # (B, P, C) bf16
    P = pools.shape[1]

    # fused attn-LN + kv projection; kv stays packed (B, P, 2C) bf16
    kv2d = ln_matmul(pools.reshape(B * P, C), p["attn_norm_g"], p["attn_norm_b"],
                     p["wkv"], out_dtype=jnp.bfloat16)
    o = attention(q2d.reshape(B, N, C), kv2d.reshape(B, P, 2 * C), num_heads)

    # proj + residual (x + attn) fused; residual chain stays f32
    x1_2d = matmul_bias(o.reshape(B * N, C), p["wproj"], p["bproj"],
                        residual=x2d, out_dtype=jnp.float32)

    # --- IRB branch: fused LN2 + fc1 + hardswish ---
    h = ln_matmul(x1_2d, p["norm2_g"], p["norm2_b"], p["w1"], p["b1"],
                  act="hardswish", out_dtype=jnp.bfloat16)
    hidden = h.shape[-1]
    h = dwconv3d_flat(h.reshape(B, N, hidden), (D, H, W), p["wc"], p["bc"],
                      act="hardswish", out_dtype=jnp.bfloat16)
    # fc2 + residual (x1 + irb) fused
    out = matmul_bias(h.reshape(B * N, hidden), p["w2"], p["b2"],
                      residual=x1_2d, out_dtype=jnp.float32)
    return out.reshape(B, N, C)


# ----------------------------------------------------------------------------
# Pure-JAX reference (f32) for a correctness check
# ----------------------------------------------------------------------------
def _ref_ln(x, g, b, eps=1e-5):
    m = x.mean(-1, keepdims=True)
    v = ((x - m) ** 2).mean(-1, keepdims=True)
    return (x - m) * jax.lax.rsqrt(v + eps) * g + b


def _ref_hswish(x):
    return x * jnp.clip(x + 3.0, 0.0, 6.0) / 6.0


def _ref_dwconv(x_cl, w27, b):
    Dd, Hh, Ww, C = x_cl.shape[1:]
    w = w27.reshape(3, 3, 3, C)
    xp = jnp.pad(x_cl, ((0, 0), (1, 1), (1, 1), (1, 1), (0, 0)))
    acc = jnp.zeros_like(x_cl)
    for kd in range(3):
        for kh in range(3):
            for kw in range(3):
                acc = acc + xp[:, kd:kd + Dd, kh:kh + Hh, kw:kw + Ww, :] * w[kd, kh, kw]
    return acc + b


def ref_block(x, D, H, W, p, num_heads, pool_ratios):
    B, N, C = x.shape
    hd = C // num_heads
    scale = hd ** (-0.5)
    xn = _ref_ln(x, p["norm1_g"], p["norm1_b"])
    q = (xn @ p["wq"]).reshape(B, N, num_heads, hd).transpose(0, 2, 1, 3)
    x_sp = xn.reshape(B, D, H, W, C)
    pools = []
    for ratio, dc in zip(pool_ratios, p["d_convs"]):
        od, oh, ow = round(D / ratio), round(H / ratio), round(W / ratio)
        pool = adaptive_avg_pool3d_cl(x_sp, (od, oh, ow))
        pool = pool + _ref_dwconv(pool, dc["w"], dc["b"])
        pools.append(pool.reshape(B, od * oh * ow, C))
    pools = _ref_ln(jnp.concatenate(pools, 1), p["attn_norm_g"], p["attn_norm_b"])
    kv = (pools @ p["wkv"]).reshape(B, -1, 2, num_heads, hd).transpose(2, 0, 3, 1, 4)
    k, v = kv[0], kv[1]
    s = (q @ k.transpose(0, 1, 3, 2)) * scale
    a = jax.nn.softmax(s, axis=-1)
    o = (a @ v).transpose(0, 2, 1, 3).reshape(B, N, C)
    x = x + o @ p["wproj"] + p["bproj"]
    xn2 = _ref_ln(x, p["norm2_g"], p["norm2_b"])
    h = _ref_hswish(xn2 @ p["w1"] + p["b1"])
    h = _ref_dwconv(h.reshape(B, D, H, W, -1), p["wc"], p["bc"])
    h = _ref_hswish(h).reshape(B, N, -1)
    return x + h @ p["w2"] + p["b2"]


# ----------------------------------------------------------------------------
# Deterministic synthetic parameters
# ----------------------------------------------------------------------------
def init_params(key, dim, mlp_ratio, pool_ratios):
    hidden = int(dim * mlp_ratio)
    keys = iter(jax.random.split(key, 24))

    def nrm(shape, s=0.1):
        return (s * jax.random.normal(next(keys), shape)).astype(jnp.float32)

    return dict(
        norm1_g=jnp.ones((dim,), jnp.float32), norm1_b=jnp.zeros((dim,), jnp.float32),
        norm2_g=jnp.ones((dim,), jnp.float32), norm2_b=jnp.zeros((dim,), jnp.float32),
        attn_norm_g=jnp.ones((dim,), jnp.float32), attn_norm_b=jnp.zeros((dim,), jnp.float32),
        wq=nrm((dim, dim)),                      # qkv_bias=False
        wkv=nrm((dim, 2 * dim)),
        wproj=nrm((dim, dim)), bproj=nrm((dim,)),
        d_convs=[dict(w=nrm((27, dim)), b=nrm((dim,))) for _ in pool_ratios],
        w1=nrm((dim, hidden)), b1=nrm((hidden,)),
        wc=nrm((27, hidden)), bc=nrm((hidden,)),
        w2=nrm((hidden, dim)), b2=nrm((dim,)),
    )


if __name__ == "__main__":
    B, D, H, W = 2, 8, 8, 8
    dim, num_heads, mlp_ratio = 32, 2, 4.0
    # pool_ratios chosen so round(size/ratio) >= 1 and bins divide evenly at these
    # small spatial dims (defaults [12,16,20,24] target much larger volumes).
    pool_ratios = [1, 2, 4]
    N = D * H * W

    key = jax.random.PRNGKey(0)
    kx, kp = jax.random.split(key)
    x = jax.random.normal(kx, (B, N, dim), jnp.float32)
    params = init_params(kp, dim, mlp_ratio, pool_ratios)

    out = block_forward(x, D, H, W, params, num_heads, pool_ratios)
    out = jax.block_until_ready(out)
    assert out.shape == (B, N, dim), out.shape
    assert bool(jnp.all(jnp.isfinite(out)))

    # f32 pure-JAX reference check (loose tolerance: kernels use bf16 MXU operands,
    # bf16 inter-kernel activations and an approximate softmax reciprocal).
    ref = jax.block_until_ready(ref_block(x, D, H, W, params, num_heads, pool_ratios))
    max_err = float(jnp.max(jnp.abs(out - ref)))
    assert max_err < 1e-1, f"max abs diff vs reference: {max_err}"

    print("KERNEL_OK")
</pallas_src>

<mosaic_0001>
module attributes {stable_mosaic.version = 11 : i64} {
  func.func @_ln_matmul_kernel(%arg0: i32, %arg1: memref<256x32xf32, #tpu.memory_space<vmem>>, %arg2: memref<1x32xf32, #tpu.memory_space<vmem>>, %arg3: memref<1x32xf32, #tpu.memory_space<vmem>>, %arg4: memref<32x32xbf16, #tpu.memory_space<vmem>>, %arg5: memref<1x32xf32, #tpu.memory_space<vmem>>, %arg6: memref<256x32xbf16, #tpu.memory_space<vmem>>, %arg7: memref<256x32xbf16, #tpu.memory_space<vmem>>) attributes {dimension_semantics = [#tpu.dimension_semantics<parallel>], iteration_bounds = array<i64: 4>, scalar_prefetch = 0 : i64, scratch_operands = 0 : i64, tpu.core_type = #tpu.core_type<tc>, window_params = [{transform_indices = @transform_0, window_bounds = array<i64: 256, 32>}, {pipeline_mode = #tpu.pipeline_mode<synchronous>, transform_indices = @transform_1, window_bounds = array<i64: 1, 32>}, {pipeline_mode = #tpu.pipeline_mode<synchronous>, transform_indices = @transform_2, window_bounds = array<i64: 1, 32>}, {pipeline_mode = #tpu.pipeline_mode<synchronous>, transform_indices = @transform_3, window_bounds = array<i64: 32, 32>}, {pipeline_mode = #tpu.pipeline_mode<synchronous>, transform_indices = @transform_4, window_bounds = array<i64: 1, 32>}, {transform_indices = @transform_5, window_bounds = array<i64: 256, 32>}, {transform_indices = @transform_6, window_bounds = array<i64: 256, 32>}]} {
    %c0 = arith.constant 0 : index
    %c0_0 = arith.constant 0 : index
    %0 = vector.load %arg1[%c0, %c0_0] : memref<256x32xf32, #tpu.memory_space<vmem>>, vector<256x32xf32>
    %cst = arith.constant dense<0.000000e+00> : vector<256xf32>
    %1 = vector.multi_reduction <add>, %0, %cst [1] : vector<256x32xf32> to vector<256xf32>
    %2 = vector.shape_cast %1 : vector<256xf32> to vector<256x1xf32>
    %cst_1 = arith.constant 3.200000e+01 : f32
    %3 = vector.broadcast %cst_1 : f32 to vector<256x1xf32>
    %4 = arith.divf %2, %3 : vector<256x1xf32>
    %5 = vector.broadcast %4 : vector<256x1xf32> to vector<256x32xf32>
    %6 = arith.subf %0, %5 : vector<256x32xf32>
    %7 = arith.mulf %6, %6 : vector<256x32xf32>
    %cst_2 = arith.constant dense<0.000000e+00> : vector<256xf32>
    %8 = vector.multi_reduction <add>, %7, %cst_2 [1] : vector<256x32xf32> to vector<256xf32>
    %9 = vector.shape_cast %8 : vector<256xf32> to vector<256x1xf32>
    %cst_3 = arith.constant 3.200000e+01 : f32
    %10 = vector.broadcast %cst_3 : f32 to vector<256x1xf32>
    %11 = arith.divf %9, %10 : vector<256x1xf32>
    %cst_4 = arith.constant 9.99999974E-6 : f32
    %12 = vector.broadcast %cst_4 : f32 to vector<256x1xf32>
    %13 = arith.addf %11, %12 : vector<256x1xf32>
    %14 = math.rsqrt %13 : vector<256x1xf32>
    %15 = vector.broadcast %14 : vector<256x1xf32> to vector<256x32xf32>
    %16 = arith.mulf %6, %15 : vector<256x32xf32>
    %c0_5 = arith.constant 0 : index
    %c0_6 = arith.constant 0 : index
    %17 = vector.load %arg2[%c0_5, %c0_6] : memref<1x32xf32, #tpu.memory_space<vmem>>, vector<1x32xf32>
    %18 = vector.broadcast %17 : vector<1x32xf32> to vector<256x32xf32>
    %19 = arith.mulf %16, %18 : vector<256x32xf32>
    %c0_7 = arith.constant 0 : index
    %c0_8 = arith.constant 0 : index
    %20 = vector.load %arg3[%c0_7, %c0_8] : memref<1x32xf32, #tpu.memory_space<vmem>>, vector<1x32xf32>
    %21 = vector.broadcast %20 : vector<1x32xf32> to vector<256x32xf32>
    %22 = arith.addf %19, %21 : vector<256x32xf32>
    %23 = arith.truncf %22 : vector<256x32xf32> to vector<256x32xbf16>
    %c0_9 = arith.constant 0 : index
    %c0_10 = arith.constant 0 : index
    %24 = vector.load %arg7[%c0_9, %c0_10] : memref<256x32xbf16, #tpu.memory_space<vmem>>, vector<256x32xbf16>
    tpu.vector_store %arg7[%c0_9, %c0_10], %23 {strides = array<i32>} : memref<256x32xbf16, #tpu.memory_space<vmem>>, vector<256x32xbf16>,
    %25 = arith.truncf %22 : vector<256x32xf32> to vector<256x32xbf16>
    %c0_11 = arith.constant 0 : index
    %c0_12 = arith.constant 0 : index
    %26 = vector.load %arg4[%c0_11, %c0_12] : memref<32x32xbf16, #tpu.memory_space<vmem>>, vector<32x32xbf16>
    %cst_13 = arith.constant dense<0.000000e+00> : vector<256x32xf32>
    %27 = tpu.matmul %25, %26, %cst_13 {dimension_numbers = #tpu.dot_dimension_numbers<[1], [0], [0], [1], [0, 0, 1, 1], [], []>} : vector<256x32xbf16>, vector<32x32xbf16>, vector<256x32xf32> -> vector<256x32xf32>
    %c0_14 = arith.constant 0 : index
    %c0_15 = arith.constant 0 : index
    %28 = vector.load %arg5[%c0_14, %c0_15] : memref<1x32xf32, #tpu.memory_space<vmem>>, vector<1x32xf32>
    %29 = vector.broadcast %28 : vector<1x32xf32> to vector<256x32xf32>
    %30 = arith.addf %27, %29 : vector<256x32xf32>
    %31 = arith.truncf %30 : vector<256x32xf32> to vector<256x32xbf16>
    %c0_16 = arith.constant 0 : index
    %c0_17 = arith.constant 0 : index
    %32 = vector.load %arg6[%c0_16, %c0_17] : memref<256x32xbf16, #tpu.memory_space<vmem>>, vector<256x32xbf16>
    tpu.vector_store %arg6[%c0_16, %c0_17], %31 {strides = array<i32>} : memref<256x32xbf16, #tpu.memory_space<vmem>>, vector<256x32xbf16>,
    return
  }
  func.func @transform_0(%arg0: i32) -> (i32, i32) {
    %c0_i32 = arith.constant 0 : i32
    %c0_i32_0 = arith.constant 0 : i32
    return %arg0, %c0_i32 : i32, i32
  }
  func.func @transform_1(%arg0: i32) -> (i32, i32) {
    %c0_i32 = arith.constant 0 : i32
    %c0_i32_0 = arith.constant 0 : i32
    %c0_i32_1 = arith.constant 0 : i32
    return %c0_i32, %c0_i32_0 : i32, i32
  }
  func.func @transform_2(%arg0: i32) -> (i32, i32) {
    %c0_i32 = arith.constant 0 : i32
    %c0_i32_0 = arith.constant 0 : i32
    %c0_i32_1 = arith.constant 0 : i32
    return %c0_i32, %c0_i32_0 : i32, i32
  }
  func.func @transform_3(%arg0: i32) -> (i32, i32) {
    %c0_i32 = arith.constant 0 : i32
    %c0_i32_0 = arith.constant 0 : i32
    %c0_i32_1 = arith.constant 0 : i32
    return %c0_i32, %c0_i32_0 : i32, i32
  }
  func.func @transform_4(%arg0: i32) -> (i32, i32) {
    %c0_i32 = arith.constant 0 : i32
    %c0_i32_0 = arith.constant 0 : i32
    %c0_i32_1 = arith.constant 0 : i32
    return %c0_i32, %c0_i32_0 : i32, i32
  }
  func.func @transform_5(%arg0: i32) -> (i32, i32) {
    %c0_i32 = arith.constant 0 : i32
    %c0_i32_0 = arith.constant 0 : i32
    return %arg0, %c0_i32 : i32, i32
  }
  func.func @transform_6(%arg0: i32) -> (i32, i32) {
    %c0_i32 = arith.constant 0 : i32
    %c0_i32_0 = arith.constant 0 : i32
    return %arg0, %c0_i32 : i32, i32
  }
}

</mosaic_0001>

<llo_original>
// kernel: tpu_custom_call.1
$region0: #{tpu_custom_call.1}
  #allocation0 [shape = 'u32[]', space=smem, size = 0x4, offset = 0x4, fixed_abs, tag = 'smem constant byte address 0x4 - core index']
  #allocation1 [shape = 'u32[144,128]{1,0:T(1,128)}', space=vmem, size = 0x12000, scoped, tag = 'internal scratch']
  %s0 = inlined_call_operand.vmem [shape: f32[1024,32], index: 0, kind: input, shape index: {}]
  %s1 = inlined_call_operand.vmem [shape: f32[1,32], index: 1, kind: input, shape index: {}]
  %s2 = inlined_call_operand.vmem [shape: f32[1,32], index: 2, kind: input, shape index: {}]
  %s3 = inlined_call_operand.vmem [shape: bf16[32,32], index: 3, kind: input, shape index: {}]
  %s4 = inlined_call_operand.vmem [shape: f32[1,32], index: 4, kind: input, shape index: {}]
  %s5 = inlined_call_operand.vmem [shape: bf16[1024,32], index: 5, kind: output, shape index: {0}]
  %s6 = inlined_call_operand.vmem [shape: bf16[1024,32], index: 6, kind: output, shape index: {1}]
  %7 = xla_tuple %s5, %s6
  %s8 = sld [smem:[#allocation0]]
  $region61: #{tpu_custom_call.1} parent=0
    _
  %s10 = ssub.s32 1, %s8
  %s11 = scalar_select 0, %s10, %s8
  loop: start=0, step=1, limit=6
  $region2: #{tpu_custom_call.1} parent=0 // loop_pre_header
    _
  $region3: #{tpu_custom_call.1} parent=0 // loop_header
    %s13 = sphi 0, %s17
    %p14 = scmp.ge.s32.totalorder %s13, 6
    %s23 = sphi 0, %s25
    %s26 = sphi 0, %s23
    %s27 = sphi 0, %s26
    %s43 = sphi 0, %s27
    %s47 = sphi 0, %s47
    %s49 = sphi 0, %s47
    %s50 = sphi 0, %s49
    %s64 = sphi 0, %s50
    %s68 = sphi 0, %s68
    %s70 = sphi 0, %s68
    %s71 = sphi 0, %s70
    %s85 = sphi 0, %s71
    %s89 = sphi 0, %s89
    %s91 = sphi 0, %s89
    %s92 = sphi 0, %s91
    %s106 = sphi 0, %s92
    %s110 = sphi 0, %s110
    %s112 = sphi 0, %s110
    %s113 = sphi 0, %s112
    %s127 = sphi 0, %s113
    %s133 = sphi 0, %s135
    %s136 = sphi 0, %s133
    %s137 = sphi 0, %s136
    %s153 = sphi 0, %s137
    %s159 = sphi 0, %s161
    %s162 = sphi 0, %s159
    %s163 = sphi 0, %s162
    %s179 = sphi 0, %s163
  $region4: #{tpu_custom_call.1} parent=0 // loop_header_branch
    %16 = sbr.rel (%p14) target = $region8
  $region5: #{tpu_custom_call.1} parent=0 // loop_body
    %s18 = ssub.s32 %s13, 1
    %s19 = ssub.s32 %s13, 2
    %s20 = sadd.s32 %s13, 1
    %s21 = ssub.s32 %s13, %s20
    %p22 = scmp.eq.s32.totalorder %s21, 0
    %s24 = sadd.s32 %s23, 1
    %s25 = scalar_select %p22, %s23, %s24
    %p28 = pneg %p22
    %p29 = scmp.eq.s32.totalorder %s13, 3
    %p30 = por %p28, %p29
    %p31 = scmp.ne.s32.totalorder %s23, %s26
    %p32 = scmp.eq.s32.totalorder %s13, 0
    %p33 = por %p31, %p32
    %p34 = scmp.ne.s32.totalorder %s23, %s26
    %p35 = scmp.eq.s32.totalorder %s18, 3
    %p36 = por %p34, %p35
    %p37 = scmp.ne.s32.totalorder %s26, %s27
    %p38 = scmp.eq.s32.totalorder %s18, 0
    %p39 = por %p37, %p38
    %p40 = scmp.ne.s32.totalorder %s26, %s27
    %p41 = scmp.eq.s32.totalorder %s19, 3
    %p42 = por %p40, %p41
    %p44 = scmp.ne.s32.totalorder %s27, %s43
    %p45 = scmp.eq.s32.totalorder %s19, 0
    %p46 = por %p44, %p45
    %s48 = sadd.s32 %s47, 1
    %p51 = scmp.eq.s32.totalorder %s13, 3
    %p52 = scmp.ne.s32.totalorder %s47, %s49
    %p53 = scmp.eq.s32.totalorder %s13, 0
    %p54 = por %p52, %p53
    %p55 = scmp.ne.s32.totalorder %s47, %s49
    %p56 = scmp.eq.s32.totalorder %s18, 3
    %p57 = por %p55, %p56
    %p58 = scmp.ne.s32.totalorder %s49, %s50
    %p59 = scmp.eq.s32.totalorder %s18, 0
    %p60 = por %p58, %p59
    %p61 = scmp.ne.s32.totalorder %s49, %s50
    %p62 = scmp.eq.s32.totalorder %s19, 3
    %p63 = por %p61, %p62
    %p65 = scmp.ne.s32.totalorder %s50, %s64
    %p66 = scmp.eq.s32.totalorder %s19, 0
    %p67 = por %p65, %p66
    %s69 = sadd.s32 %s68, 1
    %p72 = scmp.eq.s32.totalorder %s13, 3
    %p73 = scmp.ne.s32.totalorder %s68, %s70
    %p74 = scmp.eq.s32.totalorder %s13, 0
    %p75 = por %p73, %p74
    %p76 = scmp.ne.s32.totalorder %s68, %s70
    %p77 = scmp.eq.s32.totalorder %s18, 3
    %p78 = por %p76, %p77
    %p79 = scmp.ne.s32.totalorder %s70, %s71
    %p80 = scmp.eq.s32.totalorder %s18, 0
    %p81 = por %p79, %p80
    %p82 = scmp.ne.s32.totalorder %s70, %s71
    %p83 = scmp.eq.s32.totalorder %s19, 3
    %p84 = por %p82, %p83
    %p86 = scmp.ne.s32.totalorder %s71, %s85
    %p87 = scmp.eq.s32.totalorder %s19, 0
    %p88 = por %p86, %p87
    %s90 = sadd.s32 %s89, 1
    %p93 = scmp.eq.s32.totalorder %s13, 3
    %p94 = scmp.ne.s32.totalorder %s89, %s91
    %p95 = scmp.eq.s32.totalorder %s13, 0
    %p96 = por %p94, %p95
    %p97 = scmp.ne.s32.totalorder %s89, %s91
    %p98 = scmp.eq.s32.totalorder %s18, 3
    %p99 = por %p97, %p98
    %p100 = scmp.ne.s32.totalorder %s91, %s92
    %p101 = scmp.eq.s32.totalorder %s18, 0
    %p102 = por %p100, %p101
    %p103 = scmp.ne.s32.totalorder %s91, %s92
    %p104 = scmp.eq.s32.totalorder %s19, 3
    %p105 = por %p103, %p104
    %p107 = scmp.ne.s32.totalorder %s92, %s106
    %p108 = scmp.eq.s32.totalorder %s19, 0
    %p109 = por %p107, %p108
    %s111 = sadd.s32 %s110, 1
    %p114 = scmp.eq.s32.totalorder %s13, 3
    %p115 = scmp.ne.s32.totalorder %s110, %s112
    %p116 = scmp.eq.s32.totalorder %s13, 0
    %p117 = por %p115, %p116
    %p118 = scmp.ne.s32.totalorder %s110, %s112
    %p119 = scmp.eq.s32.totalorder %s18, 3
    %p120 = por %p118, %p119
    %p121 = scmp.ne.s32.totalorder %s112, %s113
    %p122 = scmp.eq.s32.totalorder %s18, 0
    %p123 = por %p121, %p122
    %p124 = scmp.ne.s32.totalorder %s112, %s113
    %p125 = scmp.eq.s32.totalorder %s19, 3
    %p126 = por %p124, %p125
    %p128 = scmp.ne.s32.totalorder %s113, %s127
    %p129 = scmp.eq.s32.totalorder %s19, 0
    %p130 = por %p128, %p129
    %s131 = ssub.s32 %s13, %s20
    %p132 = scmp.eq.s32.totalorder %s131, 0
    %s134 = sadd.s32 %s133, 1
    %s135 = scalar_select %p132, %s133, %s134
    %p138 = pneg %p132
    %p139 = scmp.eq.s32.totalorder %s13, 3
    %p140 = por %p138, %p139
    %p141 = scmp.ne.s32.totalorder %s133, %s136
    %p142 = scmp.eq.s32.totalorder %s13, 0
    %p143 = por %p141, %p142
    %p144 = scmp.ne.s32.totalorder %s133, %s136
    %p145 = scmp.eq.s32.totalorder %s18, 3
    %p146 = por %p144, %p145
    %p147 = scmp.ne.s32.totalorder %s136, %s137
    %p148 = scmp.eq.s32.totalorder %s18, 0
    %p149 = por %p147, %p148
    %p150 = scmp.ne.s32.totalorder %s136, %s137
    %p151 = scmp.eq.s32.totalorder %s19, 3
    %p152 = por %p150, %p151
    %p154 = scmp.ne.s32.totalorder %s137, %s153
    %p155 = scmp.eq.s32.totalorder %s19, 0
    %p156 = por %p154, %p155
    %s157 = ssub.s32 %s13, %s20
    %p158 = scmp.eq.s32.totalorder %s157, 0
    %s160 = sadd.s32 %s159, 1
    %s161 = scalar_select %p158, %s159, %s160
    %p164 = pneg %p158
    %p165 = scmp.eq.s32.totalorder %s13, 3
    %p166 = por %p164, %p165
    %p167 = scmp.ne.s32.totalorder %s159, %s162
    %p168 = scmp.eq.s32.totalorder %s13, 0
    %p169 = por %p167, %p168
    %p170 = scmp.ne.s32.totalorder %s159, %s162
    %p171 = scmp.eq.s32.totalorder %s18, 3
    %p172 = por %p170, %p171
    %p173 = scmp.ne.s32.totalorder %s162, %s163
    %p174 = scmp.eq.s32.totalorder %s18, 0
    %p175 = por %p173, %p174
    %p176 = scmp.ne.s32.totalorder %s162, %s163
    %p177 = scmp.eq.s32.totalorder %s19, 3
    %p178 = por %p176, %p177
    %p180 = scmp.ne.s32.totalorder %s163, %s179
    %p181 = scmp.eq.s32.totalorder %s19, 0
    %p182 = por %p180, %p181
    %p183 = scmp.le.s32.totalorder 1, %s13
    %p184 = scmp.lt.s32.totalorder %s13, 5
    %p185 = pnand %p183, %p184
    %p186 = pneg %p185
    // Predicated region
    $region9: #{tpu_custom_call.1} parent=5 // pred_check
      _
    $region10: #{tpu_custom_call.1} parent=5 // pred_check_branch
      %188 = sbr.rel (%p185) target = $region12
    $region11: #{tpu_custom_call.1} parent=5 // pred_region
      %s189 = ssub.s32 %s13, 1
      // Predicated region
      $region13: #{tpu_custom_call.1} parent=11 // pred_check
        %p190 = pneg %p60
      $region14: #{tpu_custom_call.1} parent=11 // pred_check_branch
        %192 = sbr.rel (%p190) target = $region16
      $region15: #{tpu_custom_call.1} parent=11 // pred_region
        _
      $region16: #{tpu_custom_call.1} parent=11 // pred_fallthru
        _
      // Predicated region
      $region17: #{tpu_custom_call.1} parent=11 // pred_check
        %p193 = pneg %p81
      $region18: #{tpu_custom_call.1} parent=11 // pred_check_branch
        %195 = sbr.rel (%p193) target = $region20
      $region19: #{tpu_custom_call.1} parent=11 // pred_region
        _
      $region20: #{tpu_custom_call.1} parent=11 // pred_fallthru
        _
      // Predicated region
      $region21: #{tpu_custom_call.1} parent=11 // pred_check
        %p196 = pneg %p102
      $region22: #{tpu_custom_call.1} parent=11 // pred_check_branch
        %198 = sbr.rel (%p196) target = $region24
      $region23: #{tpu_custom_call.1} parent=11 // pred_region
        _
      $region24: #{tpu_custom_call.1} parent=11 // pred_fallthru
        _
      // Predicated region
      $region25: #{tpu_custom_call.1} parent=11 // pred_check
        %p199 = pneg %p123
      $region26: #{tpu_custom_call.1} parent=11 // pred_check_branch
        %201 = sbr.rel (%p199) target = $region28
      $region27: #{tpu_custom_call.1} parent=11 // pred_region
        _
      $region28: #{tpu_custom_call.1} parent=11 // pred_fallthru
        _
    $region12: #{tpu_custom_call.1} parent=5 // pred_fallthru
      _
    %p202 = scmp.lt.s32.totalorder %s13, 4
    // Predicated region
    $region29: #{tpu_custom_call.1} parent=5 // pred_check
      %p203 = pneg %p202
    $region30: #{tpu_custom_call.1} parent=5 // pred_check_branch
      %205 = sbr.rel (%p203) target = $region32
    $region31: #{tpu_custom_call.1} parent=5 // pred_region
      // Predicated region
      $region33: #{tpu_custom_call.1} parent=31 // pred_check
        %p206 = pneg %p33
      $region34: #{tpu_custom_call.1} parent=31 // pred_check_branch
        %208 = sbr.rel (%p206) target = $region36
      $region35: #{tpu_custom_call.1} parent=31 // pred_region
        %s209 = smul.u32 32, %s13
        %p210 = scmp.lt.s32.totalorder %s209, 127
        %s211 = scalar_select %p210, %s209, 127
        %s212 = smul.addr %s211, 8
        %s213 = scalar_lea.vmem %s0, %s212
        %s214 = smul.u32 32, %s13
      $region36: #{tpu_custom_call.1} parent=31 // pred_fallthru
        _
    $region32: #{tpu_custom_call.1} parent=5 // pred_fallthru
      _
    %p215 = scmp.le.s32.totalorder 1, %s13
    %p216 = scmp.lt.s32.totalorder %s13, 5
    %p217 = pnand %p215, %p216
    %p218 = pneg %p217
    // Predicated region
    $region37: #{tpu_custom_call.1} parent=5 // pred_check
      _
    $region38: #{tpu_custom_call.1} parent=5 // pred_check_branch
      %220 = sbr.rel (%p217) target = $region40
    $region39: #{tpu_custom_call.1} parent=5 // pred_region
      %s221 = ssub.s32 %s13, 1
      %s222 = smul.u32 32, %s18
      %p223 = scmp.lt.s32.totalorder %s222, 127
      %s224 = scalar_select %p223, %s222, 127
      %s225 = smul.addr %s224, 8
      %s226 = scalar_lea.vmem %s0, %s225
      %p227 = pneg %p39
      %p228 = pneg %p36
      %p229 = pneg %p60
      %p230 = pneg %p57
      %p231 = pneg %p81
      %p232 = pneg %p78
      %p233 = pneg %p102
      %p234 = pneg %p99
      %p235 = pneg %p123
      %p236 = pneg %p120
      %p237 = pneg %p149
      %p238 = pneg %p146
      %s239 = smul.u32 32, %s18
      %p240 = scmp.lt.s32.totalorder %s239, 127
      %s241 = scalar_select %p240, %s239, 127
      %s242 = smul.addr %s241, 4
      %s243 = scalar_lea.vmem %s5, %s242
      %p244 = pneg %p175
      %p245 = pneg %p172
      %s246 = smul.u32 32, %s18
      %p247 = scmp.lt.s32.totalorder %s246, 127
      %s248 = scalar_select %p247, %s246, 127
      %s249 = smul.addr %s248, 4
      %s250 = scalar_lea.vmem %s6, %s249
      %s251 = smul.u32 32, %s18
      %p252 = scmp.lt.s32.totalorder %s251, 127
      %s253 = scalar_select %p252, %s251, 127
      %s254 = smul.addr %s253, 8
      %s255 = scalar_lea.vmem %s0, %s254
      %s256 = smul.u32 32, %s18
      %s257 = smul.u32 32, %s18
      %p258 = scmp.lt.s32.totalorder %s257, 127
      %s259 = scalar_select %p258, %s257, 127
      %s260 = smul.addr %s259, 4
      %s261 = scalar_lea.vmem %s5, %s260
      %s262 = smul.u32 32, %s18
      %s263 = smul.u32 32, %s18
      %p264 = scmp.lt.s32.totalorder %s263, 127
      %s265 = scalar_select %p264, %s263, 127
      %s266 = smul.addr %s265, 4
      %s267 = scalar_lea.vmem %s6, %s266
      %s268 = smul.u32 32, %s18
      %v270 = vld [vmem:[%s255] sm:$0xff]
      %v271 = vld [vmem:[%s255 + $0x8] sm:$0xff]
      %v272 = vld [vmem:[%s255 + $0x10] sm:$0xff]
      %v273 = vld [vmem:[%s255 + $0x18] sm:$0xff]
      %v274 = vld [vmem:[%s255 + $0x20] sm:$0xff]
      %v275 = vld [vmem:[%s255 + $0x28] sm:$0xff]
      %v276 = vld [vmem:[%s255 + $0x30] sm:$0xff]
      %v277 = vld [vmem:[%s255 + $0x38] sm:$0xff]
      %v278 = vld [vmem:[%s255 + $0x40] sm:$0xff]
      %v279 = vld [vmem:[%s255 + $0x48] sm:$0xff]
      %v280 = vld [vmem:[%s255 + $0x50] sm:$0xff]
      %v281 = vld [vmem:[%s255 + $0x58] sm:$0xff]
      %v282 = vld [vmem:[%s255 + $0x60] sm:$0xff]
      %v283 = vld [vmem:[%s255 + $0x68] sm:$0xff]
      %v284 = vld [vmem:[%s255 + $0x70] sm:$0xff]
      %v285 = vld [vmem:[%s255 + $0x78] sm:$0xff]
      %v286 = vld [vmem:[%s255 + $0x80] sm:$0xff]
      %v287 = vld [vmem:[%s255 + $0x88] sm:$0xff]
      %v288 = vld [vmem:[%s255 + $0x90] sm:$0xff]
      %v289 = vld [vmem:[%s255 + $0x98] sm:$0xff]
      %v290 = vld [vmem:[%s255 + $0xa0] sm:$0xff]
      %v291 = vld [vmem:[%s255 + $0xa8] sm:$0xff]
      %v292 = vld [vmem:[%s255 + $0xb0] sm:$0xff]
      %v293 = vld [vmem:[%s255 + $0xb8] sm:$0xff]
      %v294 = vld [vmem:[%s255 + $0xc0] sm:$0xff]
      %v295 = vld [vmem:[%s255 + $0xc8] sm:$0xff]
      %v296 = vld [vmem:[%s255 + $0xd0] sm:$0xff]
      %v297 = vld [vmem:[%s255 + $0xd8] sm:$0xff]
      %v298 = vld [vmem:[%s255 + $0xe0] sm:$0xff]
      %v299 = vld [vmem:[%s255 + $0xe8] sm:$0xff]
      %v300 = vld [vmem:[%s255 + $0xf0] sm:$0xff]
      %v301 = vld [vmem:[%s255 + $0xf8] sm:$0xff]
      %vm302 = vcmask 261120
      %v303 = vsel %vm302, %v270, 0.0
      %304 = vadd.xlane.f32.xlu0 %v303
      %v305 = vpop.xlane.xlu0 %304
      %v306 = vsel %vm302, %v271, 0.0
      %307 = vadd.xlane.f32.xlu0 %v306
      %v308 = vpop.xlane.xlu0 %307
      %v309 = vsel %vm302, %v272, 0.0
      %310 = vadd.xlane.f32.xlu0 %v309
      %v311 = vpop.xlane.xlu0 %310
      %v312 = vsel %vm302, %v273, 0.0
      %313 = vadd.xlane.f32.xlu0 %v312
      %v314 = vpop.xlane.xlu0 %313
      %v315 = vsel %vm302, %v274, 0.0
      %316 = vadd.xlane.f32.xlu0 %v315
      %v317 = vpop.xlane.xlu0 %316
      %v318 = vsel %vm302, %v275, 0.0
      %319 = vadd.xlane.f32.xlu0 %v318
      %v320 = vpop.xlane.xlu0 %319
      %v321 = vsel %vm302, %v276, 0.0
      %322 = vadd.xlane.f32.xlu0 %v321
      %v323 = vpop.xlane.xlu0 %322
      %v324 = vsel %vm302, %v277, 0.0
      %325 = vadd.xlane.f32.xlu0 %v324
      %v326 = vpop.xlane.xlu0 %325
      %v327 = vsel %vm302, %v278, 0.0
      %328 = vadd.xlane.f32.xlu0 %v327
      %v329 = vpop.xlane.xlu0 %328
      %v330 = vsel %vm302, %v279, 0.0
      %331 = vadd.xlane.f32.xlu0 %v330
      %v332 = vpop.xlane.xlu0 %331
      %v333 = vsel %vm302, %v280, 0.0
      %334 = vadd.xlane.f32.xlu0 %v333
      %v335 = vpop.xlane.xlu0 %334
      %v336 = vsel %vm302, %v281, 0.0
      %337 = vadd.xlane.f32.xlu0 %v336
      %v338 = vpop.xlane.xlu0 %337
      %v339 = vsel %vm302, %v282, 0.0
      %340 = vadd.xlane.f32.xlu0 %v339
      %v341 = vpop.xlane.xlu0 %340
      %v342 = vsel %vm302, %v283, 0.0
      %343 = vadd.xlane.f32.xlu0 %v342
      %v344 = vpop.xlane.xlu0 %343
      %v345 = vsel %vm302, %v284, 0.0
      %346 = vadd.xlane.f32.xlu0 %v345
      %v347 = vpop.xlane.xlu0 %346
      %v348 = vsel %vm302, %v285, 0.0
      %349 = vadd.xlane.f32.xlu0 %v348
      %v350 = vpop.xlane.xlu0 %349
      %v351 = vsel %vm302, %v286, 0.0
      %352 = vadd.xlane.f32.xlu0 %v351
      %v353 = vpop.xlane.xlu0 %352
      %v354 = vsel %vm302, %v287, 0.0
      %355 = vadd.xlane.f32.xlu0 %v354
      %v356 = vpop.xlane.xlu0 %355
      %v357 = vsel %vm302, %v288, 0.0
      %358 = vadd.xlane.f32.xlu0 %v357
      %v359 = vpop.xlane.xlu0 %358
      %v360 = vsel %vm302, %v289, 0.0
      %361 = vadd.xlane.f32.xlu0 %v360
      %v362 = vpop.xlane.xlu0 %361
      %v363 = vsel %vm302, %v290, 0.0
      %364 = vadd.xlane.f32.xlu0 %v363
      %v365 = vpop.xlane.xlu0 %364
      %v366 = vsel %vm302, %v291, 0.0
      %367 = vadd.xlane.f32.xlu0 %v366
      %v368 = vpop.xlane.xlu0 %367
      %v369 = vsel %vm302, %v292, 0.0
      %370 = vadd.xlane.f32.xlu0 %v369
      %v371 = vpop.xlane.xlu0 %370
      %v372 = vsel %vm302, %v293, 0.0
      %373 = vadd.xlane.f32.xlu0 %v372
      %v374 = vpop.xlane.xlu0 %373
      %v375 = vsel %vm302, %v294, 0.0
      %376 = vadd.xlane.f32.xlu0 %v375
      %v377 = vpop.xlane.xlu0 %376
      %v378 = vsel %vm302, %v295, 0.0
      %379 = vadd.xlane.f32.xlu0 %v378
      %v380 = vpop.xlane.xlu0 %379
      %v381 = vsel %vm302, %v296, 0.0
      %382 = vadd.xlane.f32.xlu0 %v381
      %v383 = vpop.xlane.xlu0 %382
      %v384 = vsel %vm302, %v297, 0.0
      %385 = vadd.xlane.f32.xlu0 %v384
      %v386 = vpop.xlane.xlu0 %385
      %v387 = vsel %vm302, %v298, 0.0
      %388 = vadd.xlane.f32.xlu0 %v387
      %v389 = vpop.xlane.xlu0 %388
      %v390 = vsel %vm302, %v299, 0.0
      %391 = vadd.xlane.f32.xlu0 %v390
      %v392 = vpop.xlane.xlu0 %391
      %v393 = vsel %vm302, %v300, 0.0
      %394 = vadd.xlane.f32.xlu0 %v393
      %v395 = vpop.xlane.xlu0 %394
      %v396 = vsel %vm302, %v301, 0.0
      %397 = vadd.xlane.f32.xlu0 %v396
      %v398 = vpop.xlane.xlu0 %397
      %v399 = vrcp.pop 32.0
      %v400 = vmul.f32 %v305, %v399
      %v401 = vmul.f32 %v308, %v399
      %v402 = vmul.f32 %v311, %v399
      %v403 = vmul.f32 %v314, %v399
      %v404 = vmul.f32 %v317, %v399
      %v405 = vmul.f32 %v320, %v399
      %v406 = vmul.f32 %v323, %v399
      %v407 = vmul.f32 %v326, %v399
      %v408 = vmul.f32 %v329, %v399
      %v409 = vmul.f32 %v332, %v399
      %v410 = vmul.f32 %v335, %v399
      %v411 = vmul.f32 %v338, %v399
      %v412 = vmul.f32 %v341, %v399
      %v413 = vmul.f32 %v344, %v399
      %v414 = vmul.f32 %v347, %v399
      %v415 = vmul.f32 %v350, %v399
      %v416 = vmul.f32 %v353, %v399
      %v417 = vmul.f32 %v356, %v399
      %v418 = vmul.f32 %v359, %v399
      %v419 = vmul.f32 %v362, %v399
      %v420 = vmul.f32 %v365, %v399
      %v421 = vmul.f32 %v368, %v399
      %v422 = vmul.f32 %v371, %v399
      %v423 = vmul.f32 %v374, %v399
      %v424 = vmul.f32 %v377, %v399
      %v425 = vmul.f32 %v380, %v399
      %v426 = vmul.f32 %v383, %v399
      %v427 = vmul.f32 %v386, %v399
      %v428 = vmul.f32 %v389, %v399
      %v429 = vmul.f32 %v392, %v399
      %v430 = vmul.f32 %v395, %v399
      %v431 = vmul.f32 %v398, %v399
      %v432 = vsub.f32 %v270, %v400
      %v433 = vsub.f32 %v271, %v401
      %v434 = vsub.f32 %v272, %v402
      %v435 = vsub.f32 %v273, %v403
      %v436 = vsub.f32 %v274, %v404
      %v437 = vsub.f32 %v275, %v405
      %v438 = vsub.f32 %v276, %v406
      %v439 = vsub.f32 %v277, %v407
      %v440 = vsub.f32 %v278, %v408
      %v441 = vsub.f32 %v279, %v409
      %v442 = vsub.f32 %v280, %v410
      %v443 = vsub.f32 %v281, %v411
      %v444 = vsub.f32 %v282, %v412
      %v445 = vsub.f32 %v283, %v413
      %v446 = vsub.f32 %v284, %v414
      %v447 = vsub.f32 %v285, %v415
      %v448 = vsub.f32 %v286, %v416
      %v449 = vsub.f32 %v287, %v417
      %v450 = vsub.f32 %v288, %v418
      %v451 = vsub.f32 %v289, %v419
      %v452 = vsub.f32 %v290, %v420
      %v453 = vsub.f32 %v291, %v421
      %v454 = vsub.f32 %v292, %v422
      %v455 = vsub.f32 %v293, %v423
      %v456 = vsub.f32 %v294, %v424
      %v457 = vsub.f32 %v295, %v425
      %v458 = vsub.f32 %v296, %v426
      %v459 = vsub.f32 %v297, %v427
      %v460 = vsub.f32 %v298, %v428
      %v461 = vsub.f32 %v299, %v429
      %v462 = vsub.f32 %v300, %v430
      %v463 = vsub.f32 %v301, %v431
      %v464 = vmul.f32 %v432, %v432
      %v465 = vmul.f32 %v433, %v433
      %v466 = vmul.f32 %v434, %v434
      %v467 = vmul.f32 %v435, %v435
      %v468 = vmul.f32 %v436, %v436
      %v469 = vmul.f32 %v437, %v437
      %v470 = vmul.f32 %v438, %v438
      %v471 = vmul.f32 %v439, %v439
      %v472 = vmul.f32 %v440, %v440
      %v473 = vmul.f32 %v441, %v441
      %v474 = vmul.f32 %v442, %v442
      %v475 = vmul.f32 %v443, %v443
      %v476 = vmul.f32 %v444, %v444
      %v477 = vmul.f32 %v445, %v445
      %v478 = vmul.f32 %v446, %v446
      %v479 = vmul.f32 %v447, %v447
      %v480 = vmul.f32 %v448, %v448
      %v481 = vmul.f32 %v449, %v449
      %v482 = vmul.f32 %v450, %v450
      %v483 = vmul.f32 %v451, %v451
      %v484 = vmul.f32 %v452, %v452
      %v485 = vmul.f32 %v453, %v453
      %v486 = vmul.f32 %v454, %v454
      %v487 = vmul.f32 %v455, %v455
      %v488 = vmul.f32 %v456, %v456
      %v489 = vmul.f32 %v457, %v457
      %v490 = vmul.f32 %v458, %v458
      %v491 = vmul.f32 %v459, %v459
      %v492 = vmul.f32 %v460, %v460
      %v493 = vmul.f32 %v461, %v461
      %v494 = vmul.f32 %v462, %v462
      %v495 = vmul.f32 %v463, %v463
      %v496 = vsel %vm302, %v464, 0.0
      %497 = vadd.xlane.f32.xlu0 %v496
      %v498 = vpop.xlane.xlu0 %497
      %v499 = vsel %vm302, %v465, 0.0
      %500 = vadd.xlane.f32.xlu0 %v499
      %v501 = vpop.xlane.xlu0 %500
      %v502 = vsel %vm302, %v466, 0.0
      %503 = vadd.xlane.f32.xlu0 %v502
      %v504 = vpop.xlane.xlu0 %503
      %v505 = vsel %vm302, %v467, 0.0
      %506 = vadd.xlane.f32.xlu0 %v505
      %v507 = vpop.xlane.xlu0 %506
      %v508 = vsel %vm302, %v468, 0.0
      %509 = vadd.xlane.f32.xlu0 %v508
      %v510 = vpop.xlane.xlu0 %509
      %v511 = vsel %vm302, %v469, 0.0
      %512 = vadd.xlane.f32.xlu0 %v511
      %v513 = vpop.xlane.xlu0 %512
      %v514 = vsel %vm302, %v470, 0.0
      %515 = vadd.xlane.f32.xlu0 %v514
      %v516 = vpop.xlane.xlu0 %515
      %v517 = vsel %vm302, %v471, 0.0
      %518 = vadd.xlane.f32.xlu0 %v517
      %v519 = vpop.xlane.xlu0 %518
      %v520 = vsel %vm302, %v472, 0.0
      %521 = vadd.xlane.f32.xlu0 %v520
      %v522 = vpop.xlane.xlu0 %521
      %v523 = vsel %vm302, %v473, 0.0
      %524 = vadd.xlane.f32.xlu0 %v523
      %v525 = vpop.xlane.xlu0 %524
      %v526 = vsel %vm302, %v474, 0.0
      %527 = vadd.xlane.f32.xlu0 %v526
      %v528 = vpop.xlane.xlu0 %527
      %v529 = vsel %vm302, %v475, 0.0
      %530 = vadd.xlane.f32.xlu0 %v529
      %v531 = vpop.xlane.xlu0 %530
      %v532 = vsel %vm302, %v476, 0.0
      %533 = vadd.xlane.f32.xlu0 %v532
      %v534 = vpop.xlane.xlu0 %533
      %v535 = vsel %vm302, %v477, 0.0
      %536 = vadd.xlane.f32.xlu0 %v535
      %v537 = vpop.xlane.xlu0 %536
      %v538 = vsel %vm302, %v478, 0.0
      %539 = vadd.xlane.f32.xlu0 %v538
      %v540 = vpop.xlane.xlu0 %539
      %v541 = vsel %vm302, %v479, 0.0
      %542 = vadd.xlane.f32.xlu0 %v541
      %v543 = vpop.xlane.xlu0 %542
      %v544 = vsel %vm302, %v480, 0.0
      %545 = vadd.xlane.f32.xlu0 %v544
      %v546 = vpop.xlane.xlu0 %545
      %v547 = vsel %vm302, %v481, 0.0
      %548 = vadd.xlane.f32.xlu0 %v547
      %v549 = vpop.xlane.xlu0 %548
      %v550 = vsel %vm302, %v482, 0.0
      %551 = vadd.xlane.f32.xlu0 %v550
      %v552 = vpop.xlane.xlu0 %551
      %v553 = vsel %vm302, %v483, 0.0
      %554 = vadd.xlane.f32.xlu0 %v553
      %v555 = vpop.xlane.xlu0 %554
      %v556 = vsel %vm302, %v484, 0.0
      %557 = vadd.xlane.f32.xlu0 %v556
      %v558 = vpop.xlane.xlu0 %557
      %v559 = vsel %vm302, %v485, 0.0
      %560 = vadd.xlane.f32.xlu0 %v559
      %v561 = vpop.xlane.xlu0 %560
      %v562 = vsel %vm302, %v486, 0.0
      %563 = vadd.xlane.f32.xlu0 %v562
      %v564 = vpop.xlane.xlu0 %563
      %v565 = vsel %vm302, %v487, 0.0
      %566 = vadd.xlane.f32.xlu0 %v565
      %v567 = vpop.xlane.xlu0 %566
      %v568 = vsel %vm302, %v488, 0.0
      %569 = vadd.xlane.f32.xlu0 %v568
      %v570 = vpop.xlane.xlu0 %569
      %v571 = vsel %vm302, %v489, 0.0
      %572 = vadd.xlane.f32.xlu0 %v571
      %v573 = vpop.xlane.xlu0 %572
      %v574 = vsel %vm302, %v490, 0.0
      %575 = vadd.xlane.f32.xlu0 %v574
      %v576 = vpop.xlane.xlu0 %575
      %v577 = vsel %vm302, %v491, 0.0
      %578 = vadd.xlane.f32.xlu0 %v577
      %v579 = vpop.xlane.xlu0 %578
      %v580 = vsel %vm302, %v492, 0.0
      %581 = vadd.xlane.f32.xlu0 %v580
      %v582 = vpop.xlane.xlu0 %581
      %v583 = vsel %vm302, %v493, 0.0
      %584 = vadd.xlane.f32.xlu0 %v583
      %v585 = vpop.xlane.xlu0 %584
      %v586 = vsel %vm302, %v494, 0.0
      %587 = vadd.xlane.f32.xlu0 %v586
      %v588 = vpop.xlane.xlu0 %587
      %v589 = vsel %vm302, %v495, 0.0
      %590 = vadd.xlane.f32.xlu0 %v589
      %v591 = vpop.xlane.xlu0 %590
      %v592 = vmul.f32 %v498, %v399
      %v593 = vmul.f32 %v501, %v399
      %v594 = vmul.f32 %v504, %v399
      %v595 = vmul.f32 %v507, %v399
      %v596 = vmul.f32 %v510, %v399
      %v597 = vmul.f32 %v513, %v399
      %v598 = vmul.f32 %v516, %v399
      %v599 = vmul.f32 %v519, %v399
      %v600 = vmul.f32 %v522, %v399
      %v601 = vmul.f32 %v525, %v399
      %v602 = vmul.f32 %v528, %v399
      %v603 = vmul.f32 %v531, %v399
      %v604 = vmul.f32 %v534, %v399
      %v605 = vmul.f32 %v537, %v399
      %v606 = vmul.f32 %v540, %v399
      %v607 = vmul.f32 %v543, %v399
      %v608 = vmul.f32 %v546, %v399
      %v609 = vmul.f32 %v549, %v399
      %v610 = vmul.f32 %v552, %v399
      %v611 = vmul.f32 %v555, %v399
      %v612 = vmul.f32 %v558, %v399
      %v613 = vmul.f32 %v561, %v399
      %v614 = vmul.f32 %v564, %v399
      %v615 = vmul.f32 %v567, %v399
      %v616 = vmul.f32 %v570, %v399
      %v617 = vmul.f32 %v573, %v399
      %v618 = vmul.f32 %v576, %v399
      %v619 = vmul.f32 %v579, %v399
      %v620 = vmul.f32 %v582, %v399
      %v621 = vmul.f32 %v585, %v399
      %v622 = vmul.f32 %v588, %v399
      %v623 = vmul.f32 %v591, %v399
      %v624 = vadd.f32 %v592, 1e-05
      %v625 = vadd.f32 %v593, 1e-05
      %v626 = vadd.f32 %v594, 1e-05
      %v627 = vadd.f32 %v595, 1e-05
      %v628 = vadd.f32 %v596, 1e-05
      %v629 = vadd.f32 %v597, 1e-05
      %v630 = vadd.f32 %v598, 1e-05
      %v631 = vadd.f32 %v599, 1e-05
      %v632 = vadd.f32 %v600, 1e-05
      %v633 = vadd.f32 %v601, 1e-05
      %v634 = vadd.f32 %v602, 1e-05
      %v635 = vadd.f32 %v603, 1e-05
      %v636 = vadd.f32 %v604, 1e-05
      %v637 = vadd.f32 %v605, 1e-05
      %v638 = vadd.f32 %v606, 1e-05
      %v639 = vadd.f32 %v607, 1e-05
      %v640 = vadd.f32 %v608, 1e-05
      %v641 = vadd.f32 %v609, 1e-05
      %v642 = vadd.f32 %v610, 1e-05
      %v643 = vadd.f32 %v611, 1e-05
      %v644 = vadd.f32 %v612, 1e-05
      %v645 = vadd.f32 %v613, 1e-05
      %v646 = vadd.f32 %v614, 1e-05
      %v647 = vadd.f32 %v615, 1e-05
      %v648 = vadd.f32 %v616, 1e-05
      %v649 = vadd.f32 %v617, 1e-05
      %v650 = vadd.f32 %v618, 1e-05
      %v651 = vadd.f32 %v619, 1e-05
      %v652 = vadd.f32 %v620, 1e-05
      %v653 = vadd.f32 %v621, 1e-05
      %v654 = vadd.f32 %v622, 1e-05
      %v655 = vadd.f32 %v623, 1e-05
      %v656 = vrsqrt.pop %v624
      %v657 = vrsqrt.pop %v625
      %v658 = vrsqrt.pop %v626
      %v659 = vrsqrt.pop %v627
      %v660 = vrsqrt.pop %v628
      %v661 = vrsqrt.pop %v629
      %v662 = vrsqrt.pop %v630
      %v663 = vrsqrt.pop %v631
      %v664 = vrsqrt.pop %v632
      %v665 = vrsqrt.pop %v633
      %v666 = vrsqrt.pop %v634
      %v667 = vrsqrt.pop %v635
      %v668 = vrsqrt.pop %v636
      %v669 = vrsqrt.pop %v637
      %v670 = vrsqrt.pop %v638
      %v671 = vrsqrt.pop %v639
      %v672 = vrsqrt.pop %v640
      %v673 = vrsqrt.pop %v641
      %v674 = vrsqrt.pop %v642
      %v675 = vrsqrt.pop %v643
      %v676 = vrsqrt.pop %v644
      %v677 = vrsqrt.pop %v645
      %v678 = vrsqrt.pop %v646
      %v679 = vrsqrt.pop %v647
      %v680 = vrsqrt.pop %v648
      %v681 = vrsqrt.pop %v649
      %v682 = vrsqrt.pop %v650
      %v683 = vrsqrt.pop %v651
      %v684 = vrsqrt.pop %v652
      %v685 = vrsqrt.pop %v653
      %v686 = vrsqrt.pop %v654
      %v687 = vrsqrt.pop %v655
      %v688 = vmul.f32 %v432, %v656
      %v689 = vmul.f32 %v433, %v657
      %v690 = vmul.f32 %v434, %v658
      %v691 = vmul.f32 %v435, %v659
      %v692 = vmul.f32 %v436, %v660
      %v693 = vmul.f32 %v437, %v661
      %v694 = vmul.f32 %v438, %v662
      %v695 = vmul.f32 %v439, %v663
      %v696 = vmul.f32 %v440, %v664
      %v697 = vmul.f32 %v441, %v665
      %v698 = vmul.f32 %v442, %v666
      %v699 = vmul.f32 %v443, %v667
      %v700 = vmul.f32 %v444, %v668
      %v701 = vmul.f32 %v445, %v669
      %v702 = vmul.f32 %v446, %v670
      %v703 = vmul.f32 %v447, %v671
      %v704 = vmul.f32 %v448, %v672
      %v705 = vmul.f32 %v449, %v673
      %v706 = vmul.f32 %v450, %v674
      %v707 = vmul.f32 %v451, %v675
      %v708 = vmul.f32 %v452, %v676
      %v709 = vmul.f32 %v453, %v677
      %v710 = vmul.f32 %v454, %v678
      %v711 = vmul.f32 %v455, %v679
      %v712 = vmul.f32 %v456, %v680
      %v713 = vmul.f32 %v457, %v681
      %v714 = vmul.f32 %v458, %v682
      %v715 = vmul.f32 %v459, %v683
      %v716 = vmul.f32 %v460, %v684
      %v717 = vmul.f32 %v461, %v685
      %v718 = vmul.f32 %v462, %v686
      %v719 = vmul.f32 %v463, %v687
      %v720 = vld [vmem:[%s1] sm:$0x1]
      %v722 = vlaneseq
      %v723 = vshrl.u32 %v722, 7
      %v724 = vsub.s32 0, %v723
      %v725 = vrot.slane %v720, %v724
      %v727 = vmul.f32 %v688, %v725
      %v728 = vmul.f32 %v689, %v725
      %v729 = vmul.f32 %v690, %v725
      %v730 = vmul.f32 %v691, %v725
      %v731 = vmul.f32 %v692, %v725
      %v732 = vmul.f32 %v693, %v725
      %v733 = vmul.f32 %v694, %v725
      %v734 = vmul.f32 %v695, %v725
      %v735 = vmul.f32 %v696, %v725
      %v736 = vmul.f32 %v697, %v725
      %v737 = vmul.f32 %v698, %v725
      %v738 = vmul.f32 %v699, %v725
      %v739 = vmul.f32 %v700, %v725
      %v740 = vmul.f32 %v701, %v725
      %v741 = vmul.f32 %v702, %v725
      %v742 = vmul.f32 %v703, %v725
      %v743 = vmul.f32 %v704, %v725
      %v744 = vmul.f32 %v705, %v725
      %v745 = vmul.f32 %v706, %v725
      %v746 = vmul.f32 %v707, %v725
      %v747 = vmul.f32 %v708, %v725
      %v748 = vmul.f32 %v709, %v725
      %v749 = vmul.f32 %v710, %v725
      %v750 = vmul.f32 %v711, %v725
      %v751 = vmul.f32 %v712, %v725
      %v752 = vmul.f32 %v713, %v725
      %v753 = vmul.f32 %v714, %v725
      %v754 = vmul.f32 %v715, %v725
      %v755 = vmul.f32 %v716, %v725
      %v756 = vmul.f32 %v717, %v725
      %v757 = vmul.f32 %v718, %v725
      %v758 = vmul.f32 %v719, %v725
      %v759 = vld [vmem:[%s2] sm:$0x1]
      %v761 = vlaneseq
      %v762 = vshrl.u32 %v761, 7
      %v763 = vsub.s32 0, %v762
      %v764 = vrot.slane %v759, %v763
      %v766 = vadd.f32 %v727, %v764
      %v767 = vadd.f32 %v728, %v764
      %v768 = vadd.f32 %v729, %v764
      %v769 = vadd.f32 %v730, %v764
      %v770 = vadd.f32 %v731, %v764
      %v771 = vadd.f32 %v732, %v764
      %v772 = vadd.f32 %v733, %v764
      %v773 = vadd.f32 %v734, %v764
      %v774 = vadd.f32 %v735, %v764
      %v775 = vadd.f32 %v736, %v764
      %v776 = vadd.f32 %v737, %v764
      %v777 = vadd.f32 %v738, %v764
      %v778 = vadd.f32 %v739, %v764
      %v779 = vadd.f32 %v740, %v764
      %v780 = vadd.f32 %v741, %v764
      %v781 = vadd.f32 %v742, %v764
      %v782 = vadd.f32 %v743, %v764
      %v783 = vadd.f32 %v744, %v764
      %v784 = vadd.f32 %v745, %v764
      %v785 = vadd.f32 %v746, %v764
      %v786 = vadd.f32 %v747, %v764
      %v787 = vadd.f32 %v748, %v764
      %v788 = vadd.f32 %v749, %v764
      %v789 = vadd.f32 %v750, %v764
      %v790 = vadd.f32 %v751, %v764
      %v791 = vadd.f32 %v752, %v764
      %v792 = vadd.f32 %v753, %v764
      %v793 = vadd.f32 %v754, %v764
      %v794 = vadd.f32 %v755, %v764
      %v795 = vadd.f32 %v756, %v764
      %v796 = vadd.f32 %v757, %v764
      %v797 = vadd.f32 %v758, %v764
      %v798 = vpack.c.bf16 %v767, %v766
      %v799 = vpack.c.bf16 %v769, %v768
      %v800 = vpack.c.bf16 %v771, %v770
      %v801 = vpack.c.bf16 %v773, %v772
      %v802 = vpack.c.bf16 %v775, %v774
      %v803 = vpack.c.bf16 %v777, %v776
      %v804 = vpack.c.bf16 %v779, %v778
      %v805 = vpack.c.bf16 %v781, %v780
      %v806 = vpack.c.bf16 %v783, %v782
      %v807 = vpack.c.bf16 %v785, %v784
      %v808 = vpack.c.bf16 %v787, %v786
      %v809 = vpack.c.bf16 %v789, %v788
      %v810 = vpack.c.bf16 %v791, %v790
      %v811 = vpack.c.bf16 %v793, %v792
      %v812 = vpack.c.bf16 %v795, %v794
      %v813 = vpack.c.bf16 %v797, %v796
      %v830 = vunpack.c.l.b16 %v798
      %v831 = vunpack.c.h.b16 %v798
      %v832 = vunpack.c.l.b16 %v799
      %v833 = vunpack.c.h.b16 %v799
      %v834 = vunpack.c.l.b16 %v800
      %v835 = vunpack.c.h.b16 %v800
      %v836 = vunpack.c.l.b16 %v801
      %v837 = vunpack.c.h.b16 %v801
      %v838 = vunpack.c.l.b16 %v802
      %v839 = vunpack.c.h.b16 %v802
      %v840 = vunpack.c.l.b16 %v803
      %v841 = vunpack.c.h.b16 %v803
      %v842 = vunpack.c.l.b16 %v804
      %v843 = vunpack.c.h.b16 %v804
      %v844 = vunpack.c.l.b16 %v805
      %v845 = vunpack.c.h.b16 %v805
      %v846 = vunpack.c.l.b16 %v806
      %v847 = vunpack.c.h.b16 %v806
      %v848 = vunpack.c.l.b16 %v807
      %v849 = vunpack.c.h.b16 %v807
      %v850 = vunpack.c.l.b16 %v808
      %v851 = vunpack.c.h.b16 %v808
      %v852 = vunpack.c.l.b16 %v809
      %v853 = vunpack.c.h.b16 %v809
      %v854 = vunpack.c.l.b16 %v810
      %v855 = vunpack.c.h.b16 %v810
      %v856 = vunpack.c.l.b16 %v811
      %v857 = vunpack.c.h.b16 %v811
      %v858 = vunpack.c.l.b16 %v812
      %v859 = vunpack.c.h.b16 %v812
      %v860 = vunpack.c.l.b16 %v813
      %v861 = vunpack.c.h.b16 %v813
      %v862 = vpack.c.b16 %v830, %v830
      %v863 = vpack.c.b16 %v831, %v831
      %v864 = vpack.c.b16 %v832, %v832
      %v865 = vpack.c.b16 %v833, %v833
      %v866 = vpack.c.b16 %v834, %v834
      %v867 = vpack.c.b16 %v835, %v835
      %v868 = vpack.c.b16 %v836, %v836
      %v869 = vpack.c.b16 %v837, %v837
      %v870 = vpack.c.b16 %v838, %v838
      %v871 = vpack.c.b16 %v839, %v839
      %v872 = vpack.c.b16 %v840, %v840
      %v873 = vpack.c.b16 %v841, %v841
      %v874 = vpack.c.b16 %v842, %v842
      %v875 = vpack.c.b16 %v843, %v843
      %v876 = vpack.c.b16 %v844, %v844
      %v877 = vpack.c.b16 %v845, %v845
      %v878 = vpack.c.b16 %v846, %v846
      %v879 = vpack.c.b16 %v847, %v847
      %v880 = vpack.c.b16 %v848, %v848
      %v881 = vpack.c.b16 %v849, %v849
      %v882 = vpack.c.b16 %v850, %v850
      %v883 = vpack.c.b16 %v851, %v851
      %v884 = vpack.c.b16 %v852, %v852
      %v885 = vpack.c.b16 %v853, %v853
      %v886 = vpack.c.b16 %v854, %v854
      %v887 = vpack.c.b16 %v855, %v855
      %v888 = vpack.c.b16 %v856, %v856
      %v889 = vpack.c.b16 %v857, %v857
      %v890 = vpack.c.b16 %v858, %v858
      %v891 = vpack.c.b16 %v859, %v859
      %v892 = vpack.c.b16 %v860, %v860
      %v893 = vpack.c.b16 %v861, %v861
      %vm926 = vcmask 257024
      %927 = vst.msk [vmem:[%s267] sm:$0xf] %vm926, %v862
      %928 = vst.msk [vmem:[%s267 + $0x4] sm:$0xf] %vm926, %v863
      %929 = vst.msk [vmem:[%s267 + $0x8] sm:$0xf] %vm926, %v864
      %930 = vst.msk [vmem:[%s267 + $0xc] sm:$0xf] %vm926, %v865
      %931 = vst.msk [vmem:[%s267 + $0x10] sm:$0xf] %vm926, %v866
      %932 = vst.msk [vmem:[%s267 + $0x14] sm:$0xf] %vm926, %v867
      %933 = vst.msk [vmem:[%s267 + $0x18] sm:$0xf] %vm926, %v868
      %934 = vst.msk [vmem:[%s267 + $0x1c] sm:$0xf] %vm926, %v869
      %935 = vst.msk [vmem:[%s267 + $0x20] sm:$0xf] %vm926, %v870
      %936 = vst.msk [vmem:[%s267 + $0x24] sm:$0xf] %vm926, %v871
      %937 = vst.msk [vmem:[%s267 + $0x28] sm:$0xf] %vm926, %v872
      %938 = vst.msk [vmem:[%s267 + $0x2c] sm:$0xf] %vm926, %v873
      %939 = vst.msk [vmem:[%s267 + $0x30] sm:$0xf] %vm926, %v874
      %940 = vst.msk [vmem:[%s267 + $0x34] sm:$0xf] %vm926, %v875
      %941 = vst.msk [vmem:[%s267 + $0x38] sm:$0xf] %vm926, %v876
      %942 = vst.msk [vmem:[%s267 + $0x3c] sm:$0xf] %vm926, %v877
      %943 = vst.msk [vmem:[%s267 + $0x40] sm:$0xf] %vm926, %v878
      %944 = vst.msk [vmem:[%s267 + $0x44] sm:$0xf] %vm926, %v879
      %945 = vst.msk [vmem:[%s267 + $0x48] sm:$0xf] %vm926, %v880
      %946 = vst.msk [vmem:[%s267 + $0x4c] sm:$0xf] %vm926, %v881
      %947 = vst.msk [vmem:[%s267 + $0x50] sm:$0xf] %vm926, %v882
      %948 = vst.msk [vmem:[%s267 + $0x54] sm:$0xf] %vm926, %v883
      %949 = vst.msk [vmem:[%s267 + $0x58] sm:$0xf] %vm926, %v884
      %950 = vst.msk [vmem:[%s267 + $0x5c] sm:$0xf] %vm926, %v885
      %951 = vst.msk [vmem:[%s267 + $0x60] sm:$0xf] %vm926, %v886
      %952 = vst.msk [vmem:[%s267 + $0x64] sm:$0xf] %vm926, %v887
      %953 = vst.msk [vmem:[%s267 + $0x68] sm:$0xf] %vm926, %v888
      %954 = vst.msk [vmem:[%s267 + $0x6c] sm:$0xf] %vm926, %v889
      %955 = vst.msk [vmem:[%s267 + $0x70] sm:$0xf] %vm926, %v890
      %956 = vst.msk [vmem:[%s267 + $0x74] sm:$0xf] %vm926, %v891
      %957 = vst.msk [vmem:[%s267 + $0x78] sm:$0xf] %vm926, %v892
      %958 = vst.msk [vmem:[%s267 + $0x7c] sm:$0xf] %vm926, %v893
      %v959 = vld [vmem:[%s3] sm:$0xf]
      %v960 = vld [vmem:[%s3 + $0x4] sm:$0xf]
      %v961 = vld [vmem:[%s3 + $0x8] sm:$0xf]
      %v962 = vld [vmem:[%s3 + $0xc] sm:$0xf]
      %v963 = vld [vmem:[%s4] sm:$0x1]
      %v965 = vlaneseq
      %v966 = vshrl.u32 %v965, 7
      %v967 = vsub.s32 0, %v966
      %v968 = vrot.slane %v963, %v967
      %v974 = vunpack.c.l.b16 %v959
      %v975 = vunpack.c.l.b16 %v960
      %v976 = vunpack.c.l.b16 %v961
      %v977 = vunpack.c.l.b16 %v962
      %v978 = vpack.c.b16 %v975, %v974
      %v979 = vpack.c.b16 %v977, %v976
      %v983 = vsel %vm302, %v798, 0
      %v986 = vsel %vm302, %v799, 0
      %v989 = vsel %vm302, %v800, 0
      %v992 = vsel %vm302, %v801, 0
      %v995 = vsel %vm302, %v802, 0
      %v998 = vsel %vm302, %v803, 0
      %v1001 = vsel %vm302, %v804, 0
      %v1004 = vsel %vm302, %v805, 0
      %v1007 = vsel %vm302, %v806, 0
      %v1010 = vsel %vm302, %v807, 0
      %v1013 = vsel %vm302, %v808, 0
      %v1016 = vsel %vm302, %v809, 0
      %v1019 = vsel %vm302, %v810, 0
      %v1022 = vsel %vm302, %v811, 0
      %v1025 = vsel %vm302, %v812, 0
      %v1028 = vsel %vm302, %v813, 0
      %1030 = vmatprep.subr.bf16.mxu0 0
      %1031 = vmatpush1.bf16.msra.mxu0 %v978
      %1032 = vmatprep.subr.bf16.mxu0 0
      %1033 = vmatpush1.bf16.msra.mxu0 %v979
      %1034 = vmatprep.subr.bf16.mxu0 0
      %1035 = vmatpush1.bf16.msra.mxu0 0
      %1036 = vmatprep.subr.bf16.mxu0 0
      %1037 = vmatpush1.bf16.msra.mxu0 0
      %1038 = vmatprep.subr.bf16.mxu0 0
      %1039 = vmatpush1.bf16.msra.mxu0 0
      %1040 = vmatprep.subr.bf16.mxu0 0
      %1041 = vmatpush1.bf16.msra.mxu0 0
      %1042 = vmatprep.subr.bf16.mxu0 0
      %1043 = vmatpush1.bf16.msra.mxu0 0
      %1044 = vmatprep.subr.bf16.mxu0 0
      %1045 = vmatpush1.bf16.msra.mxu0 0
      %1046 = vmatprep.subr.bf16.mxu0 0
      %1047 = vmatpush1.bf16.msra.mxu0 0
      %1048 = vmatprep.subr.bf16.mxu0 0
      %1049 = vmatpush1.bf16.msra.mxu0 0
      %1050 = vmatprep.subr.bf16.mxu0 0
      %1051 = vmatpush1.bf16.msra.mxu0 0
      %1052 = vmatprep.subr.bf16.mxu0 0
      %1053 = vmatpush1.bf16.msra.mxu0 0
      %1054 = vmatprep.subr.bf16.mxu0 0
      %1055 = vmatpush1.bf16.msra.mxu0 0
      %1056 = vmatprep.subr.bf16.mxu0 0
      %1057 = vmatpush1.bf16.msra.mxu0 0
      %1058 = vmatprep.subr.bf16.mxu0 0
      %1059 = vmatpush1.bf16.msra.mxu0 0
      %1060 = vmatprep.subr.bf16.mxu0 0
      %1061 = vmatpush1.bf16.msra.mxu0 0
      %1062 = vmatprep.mubr.bf16.mxu0 0
      %1063 = vmatmul.mubr.bf16.gmra.mrb[0].mxu0 %v983
      %v1064 = vpop.f32.mrb[0].mxu0
      %v1065 = vadd.f32 %v968, %v1064
      %v1066 = vpop.f32.mrb[0].mxu0
      %v1067 = vpop.f32.mrb[0].mxu0
      %v1068 = vadd.f32 %v968, %v1067
      %v1069 = vpop.f32.mrb[0].mxu0
      %1070 = vmatprep.mubr.bf16.mxu0 0
      %1071 = vmatmul.mubr.bf16.gmra.mrb[0].mxu0 %v986
      %v1072 = vpop.f32.mrb[0].mxu0
      %v1073 = vadd.f32 %v968, %v1072
      %v1074 = vpop.f32.mrb[0].mxu0
      %v1075 = vpop.f32.mrb[0].mxu0
      %v1076 = vadd.f32 %v968, %v1075
      %v1077 = vpop.f32.mrb[0].mxu0
      %1078 = vmatprep.mubr.bf16.mxu0 0
      %1079 = vmatmul.mubr.bf16.gmra.mrb[0].mxu0 %v989
      %v1080 = vpop.f32.mrb[0].mxu0
      %v1081 = vadd.f32 %v968, %v1080
      %v1082 = vpop.f32.mrb[0].mxu0
      %v1083 = vpop.f32.mrb[0].mxu0
      %v1084 = vadd.f32 %v968, %v1083
      %v1085 = vpop.f32.mrb[0].mxu0
      %1086 = vmatprep.mubr.bf16.mxu0 0
      %1087 = vmatmul.mubr.bf16.gmra.mrb[0].mxu0 %v992
      %v1088 = vpop.f32.mrb[0].mxu0
      %v1089 = vadd.f32 %v968, %v1088
      %v1090 = vpop.f32.mrb[0].mxu0
      %v1091 = vpop.f32.mrb[0].mxu0
      %v1092 = vadd.f32 %v968, %v1091
      %v1093 = vpop.f32.mrb[0].mxu0
      %1094 = vmatprep.mubr.bf16.mxu0 0
      %1095 = vmatmul.mubr.bf16.gmra.mrb[0].mxu0 %v995
      %v1096 = vpop.f32.mrb[0].mxu0
      %v1097 = vadd.f32 %v968, %v1096
      %v1098 = vpop.f32.mrb[0].mxu0
      %v1099 = vpop.f32.mrb[0].mxu0
      %v1100 = vadd.f32 %v968, %v1099
      %v1101 = vpop.f32.mrb[0].mxu0
      %1102 = vmatprep.mubr.bf16.mxu0 0
      %1103 = vmatmul.mubr.bf16.gmra.mrb[0].mxu0 %v998
      %v1104 = vpop.f32.mrb[0].mxu0
      %v1105 = vadd.f32 %v968, %v1104
      %v1106 = vpop.f32.mrb[0].mxu0
      %v1107 = vpop.f32.mrb[0].mxu0
      %v1108 = vadd.f32 %v968, %v1107
      %v1109 = vpop.f32.mrb[0].mxu0
      %1110 = vmatprep.mubr.bf16.mxu0 0
      %1111 = vmatmul.mubr.bf16.gmra.mrb[0].mxu0 %v1001
      %v1112 = vpop.f32.mrb[0].mxu0
      %v1113 = vadd.f32 %v968, %v1112
      %v1114 = vpop.f32.mrb[0].mxu0
      %v1115 = vpop.f32.mrb[0].mxu0
      %v1116 = vadd.f32 %v968, %v1115
      %v1117 = vpop.f32.mrb[0].mxu0
      %1118 = vmatprep.mubr.bf16.mxu0 0
      %1119 = vmatmul.mubr.bf16.gmra.mrb[0].mxu0 %v1004
      %v1120 = vpop.f32.mrb[0].mxu0
      %v1121 = vadd.f32 %v968, %v1120
      %v1122 = vpop.f32.mrb[0].mxu0
      %v1123 = vpop.f32.mrb[0].mxu0
      %v1124 = vadd.f32 %v968, %v1123
      %v1125 = vpop.f32.mrb[0].mxu0
      %1126 = vmatprep.mubr.bf16.mxu0 0
      %1127 = vmatmul.mubr.bf16.gmra.mrb[0].mxu0 %v1007
      %v1128 = vpop.f32.mrb[0].mxu0
      %v1129 = vadd.f32 %v968, %v1128
      %v1130 = vpop.f32.mrb[0].mxu0
      %v1131 = vpop.f32.mrb[0].mxu0
      %v1132 = vadd.f32 %v968, %v1131
      %v1133 = vpop.f32.mrb[0].mxu0
      %1134 = vmatprep.mubr.bf16.mxu0 0
      %1135 = vmatmul.mubr.bf16.gmra.mrb[0].mxu0 %v1010
      %v1136 = vpop.f32.mrb[0].mxu0
      %v1137 = vadd.f32 %v968, %v1136
      %v1138 = vpop.f32.mrb[0].mxu0
      %v1139 = vpop.f32.mrb[0].mxu0
      %v1140 = vadd.f32 %v968, %v1139
      %v1141 = vpop.f32.mrb[0].mxu0
      %1142 = vmatprep.mubr.bf16.mxu0 0
      %1143 = vmatmul.mubr.bf16.gmra.mrb[0].mxu0 %v1013
      %v1144 = vpop.f32.mrb[0].mxu0
      %v1145 = vadd.f32 %v968, %v1144
      %v1146 = vpop.f32.mrb[0].mxu0
      %v1147 = vpop.f32.mrb[0].mxu0
      %v1148 = vadd.f32 %v968, %v1147
      %v1149 = vpop.f32.mrb[0].mxu0
      %1150 = vmatprep.mubr.bf16.mxu0 0
      %1151 = vmatmul.mubr.bf16.gmra.mrb[0].mxu0 %v1016
      %v1152 = vpop.f32.mrb[0].mxu0
      %v1153 = vadd.f32 %v968, %v1152
      %v1154 = vpop.f32.mrb[0].mxu0
      %v1155 = vpop.f32.mrb[0].mxu0
      %v1156 = vadd.f32 %v968, %v1155
      %v1157 = vpop.f32.mrb[0].mxu0
      %1158 = vmatprep.mubr.bf16.mxu0 0
      %1159 = vmatmul.mubr.bf16.gmra.mrb[0].mxu0 %v1019
      %v1160 = vpop.f32.mrb[0].mxu0
      %v1161 = vadd.f32 %v968, %v1160
      %v1162 = vpop.f32.mrb[0].mxu0
      %v1163 = vpop.f32.mrb[0].mxu0
      %v1164 = vadd.f32 %v968, %v1163
      %v1165 = vpop.f32.mrb[0].mxu0
      %1166 = vmatprep.mubr.bf16.mxu0 0
      %1167 = vmatmul.mubr.bf16.gmra.mrb[0].mxu0 %v1022
      %v1168 = vpop.f32.mrb[0].mxu0
      %v1169 = vadd.f32 %v968, %v1168
      %v1170 = vpop.f32.mrb[0].mxu0
      %v1171 = vpop.f32.mrb[0].mxu0
      %v1172 = vadd.f32 %v968, %v1171
      %v1173 = vpop.f32.mrb[0].mxu0
      %1174 = vmatprep.mubr.bf16.mxu0 0
      %1175 = vmatmul.mubr.bf16.gmra.mrb[0].mxu0 %v1025
      %v1176 = vpop.f32.mrb[0].mxu0
      %v1177 = vadd.f32 %v968, %v1176
      %v1178 = vpop.f32.mrb[0].mxu0
      %v1179 = vpop.f32.mrb[0].mxu0
      %v1180 = vadd.f32 %v968, %v1179
      %v1181 = vpop.f32.mrb[0].mxu0
      %1182 = vmatprep.mubr.bf16.mxu0 0
      %1183 = vmatmul.mubr.bf16.gmra.mrb[0].mxu0 %v1028
      %v1184 = vpop.f32.mrb[0].mxu0
      %v1185 = vadd.f32 %v968, %v1184
      %v1186 = vpop.f32.mrb[0].mxu0
      %v1187 = vpop.f32.mrb[0].mxu0
      %v1188 = vadd.f32 %v968, %v1187
      %v1189 = vpop.f32.mrb[0].mxu0
      %1190 = vdwg.mxu0
      %v1191 = vpack.c.bf16 %v1068, %v1065
      %v1192 = vpack.c.bf16 %v1076, %v1073
      %v1193 = vpack.c.bf16 %v1084, %v1081
      %v1194 = vpack.c.bf16 %v1092, %v1089
      %v1195 = vpack.c.bf16 %v1100, %v1097
      %v1196 = vpack.c.bf16 %v1108, %v1105
      %v1197 = vpack.c.bf16 %v1116, %v1113
      %v1198 = vpack.c.bf16 %v1124, %v1121
      %v1199 = vpack.c.bf16 %v1132, %v1129
      %v1200 = vpack.c.bf16 %v1140, %v1137
      %v1201 = vpack.c.bf16 %v1148, %v1145
      %v1202 = vpack.c.bf16 %v1156, %v1153
      %v1203 = vpack.c.bf16 %v1164, %v1161
      %v1204 = vpack.c.bf16 %v1172, %v1169
      %v1205 = vpack.c.bf16 %v1180, %v1177
      %v1206 = vpack.c.bf16 %v1188, %v1185
      %v1223 = vunpack.c.l.b16 %v1191
      %v1224 = vunpack.c.h.b16 %v1191
      %v1225 = vunpack.c.l.b16 %v1192
      %v1226 = vunpack.c.h.b16 %v1192
      %v1227 = vunpack.c.l.b16 %v1193
      %v1228 = vunpack.c.h.b16 %v1193
      %v1229 = vunpack.c.l.b16 %v1194
      %v1230 = vunpack.c.h.b16 %v1194
      %v1231 = vunpack.c.l.b16 %v1195
      %v1232 = vunpack.c.h.b16 %v1195
      %v1233 = vunpack.c.l.b16 %v1196
      %v1234 = vunpack.c.h.b16 %v1196
      %v1235 = vunpack.c.l.b16 %v1197
      %v1236 = vunpack.c.h.b16 %v1197
      %v1237 = vunpack.c.l.b16 %v1198
      %v1238 = vunpack.c.h.b16 %v1198
      %v1239 = vunpack.c.l.b16 %v1199
      %v1240 = vunpack.c.h.b16 %v1199
      %v1241 = vunpack.c.l.b16 %v1200
      %v1242 = vunpack.c.h.b16 %v1200
      %v1243 = vunpack.c.l.b16 %v1201
      %v1244 = vunpack.c.h.b16 %v1201
      %v1245 = vunpack.c.l.b16 %v1202
      %v1246 = vunpack.c.h.b16 %v1202
      %v1247 = vunpack.c.l.b16 %v1203
      %v1248 = vunpack.c.h.b16 %v1203
      %v1249 = vunpack.c.l.b16 %v1204
      %v1250 = vunpack.c.h.b16 %v1204
      %v1251 = vunpack.c.l.b16 %v1205
      %v1252 = vunpack.c.h.b16 %v1205
      %v1253 = vunpack.c.l.b16 %v1206
      %v1254 = vunpack.c.h.b16 %v1206
      %v1255 = vpack.c.b16 %v1223, %v1223
      %v1256 = vpack.c.b16 %v1224, %v1224
      %v1257 = vpack.c.b16 %v1225, %v1225
      %v1258 = vpack.c.b16 %v1226, %v1226
      %v1259 = vpack.c.b16 %v1227, %v1227
      %v1260 = vpack.c.b16 %v1228, %v1228
      %v1261 = vpack.c.b16 %v1229, %v1229
      %v1262 = vpack.c.b16 %v1230, %v1230
      %v1263 = vpack.c.b16 %v1231, %v1231
      %v1264 = vpack.c.b16 %v1232, %v1232
      %v1265 = vpack.c.b16 %v1233, %v1233
      %v1266 = vpack.c.b16 %v1234, %v1234
      %v1267 = vpack.c.b16 %v1235, %v1235
      %v1268 = vpack.c.b16 %v1236, %v1236
      %v1269 = vpack.c.b16 %v1237, %v1237
      %v1270 = vpack.c.b16 %v1238, %v1238
      %v1271 = vpack.c.b16 %v1239, %v1239
      %v1272 = vpack.c.b16 %v1240, %v1240
      %v1273 = vpack.c.b16 %v1241, %v1241
      %v1274 = vpack.c.b16 %v1242, %v1242
      %v1275 = vpack.c.b16 %v1243, %v1243
      %v1276 = vpack.c.b16 %v1244, %v1244
      %v1277 = vpack.c.b16 %v1245, %v1245
      %v1278 = vpack.c.b16 %v1246, %v1246
      %v1279 = vpack.c.b16 %v1247, %v1247
      %v1280 = vpack.c.b16 %v1248, %v1248
      %v1281 = vpack.c.b16 %v1249, %v1249
      %v1282 = vpack.c.b16 %v1250, %v1250
      %v1283 = vpack.c.b16 %v1251, %v1251
      %v1284 = vpack.c.b16 %v1252, %v1252
      %v1285 = vpack.c.b16 %v1253, %v1253
      %v1286 = vpack.c.b16 %v1254, %v1254
      %1319 = vst.msk [vmem:[%s261] sm:$0xf] %vm926, %v1255
      %1320 = vst.msk [vmem:[%s261 + $0x4] sm:$0xf] %vm926, %v1256
      %1321 = vst.msk [vmem:[%s261 + $0x8] sm:$0xf] %vm926, %v1257
      %1322 = vst.msk [vmem:[%s261 + $0xc] sm:$0xf] %vm926, %v1258
      %1323 = vst.msk [vmem:[%s261 + $0x10] sm:$0xf] %vm926, %v1259
      %1324 = vst.msk [vmem:[%s261 + $0x14] sm:$0xf] %vm926, %v1260
      %1325 = vst.msk [vmem:[%s261 + $0x18] sm:$0xf] %vm926, %v1261
      %1326 = vst.msk [vmem:[%s261 + $0x1c] sm:$0xf] %vm926, %v1262
      %1327 = vst.msk [vmem:[%s261 + $0x20] sm:$0xf] %vm926, %v1263
      %1328 = vst.msk [vmem:[%s261 + $0x24] sm:$0xf] %vm926, %v1264
      %1329 = vst.msk [vmem:[%s261 + $0x28] sm:$0xf] %vm926, %v1265
      %1330 = vst.msk [vmem:[%s261 + $0x2c] sm:$0xf] %vm926, %v1266
      %1331 = vst.msk [vmem:[%s261 + $0x30] sm:$0xf] %vm926, %v1267
      %1332 = vst.msk [vmem:[%s261 + $0x34] sm:$0xf] %vm926, %v1268
      %1333 = vst.msk [vmem:[%s261 + $0x38] sm:$0xf] %vm926, %v1269
      %1334 = vst.msk [vmem:[%s261 + $0x3c] sm:$0xf] %vm926, %v1270
      %1335 = vst.msk [vmem:[%s261 + $0x40] sm:$0xf] %vm926, %v1271
      %1336 = vst.msk [vmem:[%s261 + $0x44] sm:$0xf] %vm926, %v1272
      %1337 = vst.msk [vmem:[%s261 + $0x48] sm:$0xf] %vm926, %v1273
      %1338 = vst.msk [vmem:[%s261 + $0x4c] sm:$0xf] %vm926, %v1274
      %1339 = vst.msk [vmem:[%s261 + $0x50] sm:$0xf] %vm926, %v1275
      %1340 = vst.msk [vmem:[%s261 + $0x54] sm:$0xf] %vm926, %v1276
      %1341 = vst.msk [vmem:[%s261 + $0x58] sm:$0xf] %vm926, %v1277
      %1342 = vst.msk [vmem:[%s261 + $0x5c] sm:$0xf] %vm926, %v1278
      %1343 = vst.msk [vmem:[%s261 + $0x60] sm:$0xf] %vm926, %v1279
      %1344 = vst.msk [vmem:[%s261 + $0x64] sm:$0xf] %vm926, %v1280
      %1345 = vst.msk [vmem:[%s261 + $0x68] sm:$0xf] %vm926, %v1281
      %1346 = vst.msk [vmem:[%s261 + $0x6c] sm:$0xf] %vm926, %v1282
      %1347 = vst.msk [vmem:[%s261 + $0x70] sm:$0xf] %vm926, %v1283
      %1348 = vst.msk [vmem:[%s261 + $0x74] sm:$0xf] %vm926, %v1284
      %1349 = vst.msk [vmem:[%s261 + $0x78] sm:$0xf] %vm926, %v1285
      %1350 = vst.msk [vmem:[%s261 + $0x7c] sm:$0xf] %vm926, %v1286
      %s1351 = smul.u32 32, %s18
      %p1352 = scmp.lt.s32.totalorder %s1351, 127
      %s1353 = scalar_select %p1352, %s1351, 127
      %s1354 = smul.addr %s1353, 4
      %s1355 = scalar_lea.vmem %s5, %s1354
      %s1356 = smul.u32 32, %s18
      %p1357 = scmp.lt.s32.totalorder %s1356, 127
      %s1358 = scalar_select %p1357, %s1356, 127
      %s1359 = smul.addr %s1358, 4
      %s1360 = scalar_lea.vmem %s6, %s1359
      // Predicated region
      $region41: #{tpu_custom_call.1} parent=39 // pred_check
        %p1361 = pneg %p146
      $region42: #{tpu_custom_call.1} parent=39 // pred_check_branch
        %1363 = sbr.rel (%p1361) target = $region44
      $region43: #{tpu_custom_call.1} parent=39 // pred_region
        %s1364 = smul.u32 32, %s18
      $region44: #{tpu_custom_call.1} parent=39 // pred_fallthru
        _
      // Predicated region
      $region45: #{tpu_custom_call.1} parent=39 // pred_check
        %p1365 = pneg %p172
      $region46: #{tpu_custom_call.1} parent=39 // pred_check_branch
        %1367 = sbr.rel (%p1365) target = $region48
      $region47: #{tpu_custom_call.1} parent=39 // pred_region
        %s1368 = smul.u32 32, %s18
      $region48: #{tpu_custom_call.1} parent=39 // pred_fallthru
        _
    $region40: #{tpu_custom_call.1} parent=5 // pred_fallthru
      _
    %p1369 = scmp.le.s32.totalorder 2, %s13
    // Predicated region
    $region49: #{tpu_custom_call.1} parent=5 // pred_check
      %p1370 = pneg %p1369
    $region50: #{tpu_custom_call.1} parent=5 // pred_check_branch
      %1372 = sbr.rel (%p1370) target = $region52
    $region51: #{tpu_custom_call.1} parent=5 // pred_region
      %s1373 = ssub.s32 %s13, 2
      // Predicated region
      $region53: #{tpu_custom_call.1} parent=51 // pred_check
        %p1374 = pneg %p152
      $region54: #{tpu_custom_call.1} parent=51 // pred_check_branch
        %1376 = sbr.rel (%p1374) target = $region56
      $region55: #{tpu_custom_call.1} parent=51 // pred_region
        %s1377 = smul.u32 32, %s19
        %p1378 = scmp.lt.s32.totalorder %s1377, 127
        %s1379 = scalar_select %p1378, %s1377, 127
        %s1380 = smul.addr %s1379, 4
        %s1381 = scalar_lea.vmem %s5, %s1380
      $region56: #{tpu_custom_call.1} parent=51 // pred_fallthru
        _
      // Predicated region
      $region57: #{tpu_custom_call.1} parent=51 // pred_check
        %p1382 = pneg %p178
      $region58: #{tpu_custom_call.1} parent=51 // pred_check_branch
        %1384 = sbr.rel (%p1382) target = $region60
      $region59: #{tpu_custom_call.1} parent=51 // pred_region
        %s1385 = smul.u32 32, %s19
        %p1386 = scmp.lt.s32.totalorder %s1385, 127
        %s1387 = scalar_select %p1386, %s1385, 127
        %s1388 = smul.addr %s1387, 4
        %s1389 = scalar_lea.vmem %s6, %s1388
      $region60: #{tpu_custom_call.1} parent=51 // pred_fallthru
        _
    $region52: #{tpu_custom_call.1} parent=5 // pred_fallthru
      _
  $region6: #{tpu_custom_call.1} parent=0 // loop_footer
    %s17 = sadd.s32 1, %s13
  $region7: #{tpu_custom_call.1} parent=0 // loop_footer_branch
    %12 = sbr.rel target = $region3
  $region8: #{tpu_custom_call.1} parent=0 // loop_exit
    _

</llo_original>
